<compile_context>
chip_gen: v7x
topology: tpu7x:2x2x1
jax: 0.10.0
libtpu: 0.0.40
codegen_flags: <defaults>
</compile_context>

<pallas_src>
import jax
import jax.numpy as jnp
import numpy as np
from jax.experimental import pallas as pl
from jax.experimental.pallas import tpu as pltpu

EPS = 1e-6

VEC_NAMES = ('ln1_w', 'ln1_b', 'b1', 'b2', 'b_sca', 'b3',
             'beta', 'gamma', 'ln2_w', 'ln2_b', 'b4', 'b5')
MAT_NAMES = ('w1', 'k2', 'w_sca', 'w3', 'w4', 'w5')


# --------------------------------------------------------------------------
# host-side parameter packing
# --------------------------------------------------------------------------
def pack_vectors(params, align=8):
    """Stack all per-channel (k,1) vectors into one (rows,1) slab, 8-row aligned."""
    blocks, offsets, off = [], {}, 0
    for nm in VEC_NAMES:
        v = jnp.asarray(params[nm], jnp.float32).reshape(-1, 1)
        pad = (-v.shape[0]) % align
        blocks.append(jnp.pad(v, ((0, pad), (0, 0))))
        offsets[nm] = off
        off += v.shape[0] + pad
    return jnp.concatenate(blocks, axis=0), offsets


def pack_matrices(params, row_align=8, cols=16):
    """Stack the small weight matrices into one (rows, cols) slab, 8-row aligned."""
    blocks, offsets, off = [], {}, 0
    for nm in MAT_NAMES:
        m = jnp.asarray(params[nm], jnp.float32)
        r, c = m.shape
        pr = (-r) % row_align
        blocks.append(jnp.pad(m, ((0, pr), (0, cols - c))))
        offsets[nm] = (off, r, c)
        off += r + pr
    return jnp.concatenate(blocks, axis=0), offsets


def build_edge_masks(H, W):
    """Precompute the 8 non-center depthwise-conv edge masks, flattened to HW lanes."""
    hh, ww = np.meshgrid(np.arange(H), np.arange(W), indexing='ij')
    hh, ww = hh.reshape(-1), ww.reshape(-1)
    hm = {0: hh >= 1, 1: np.ones_like(hh, bool), 2: hh <= H - 2}
    wm = {0: ww >= 1, 1: np.ones_like(ww, bool), 2: ww <= W - 2}
    rows = []
    for dh in range(3):
        for dw in range(3):
            if dh == 1 and dw == 1:
                continue
            rows.append((hm[dh] & wm[dw]).astype(np.float32))
    return jnp.asarray(np.stack(rows, axis=0))           # (8, HW)


# --------------------------------------------------------------------------
# kernel
# --------------------------------------------------------------------------
def make_nafblock_kernel(H, W, C, DW, FFN, B, vec_off, mat_off):
    DW2 = DW // 2
    FFN2 = FFN // 2
    HW = H * W

    def kernel(x_ref, vec_ref, mat_ref, mask_ref, out_ref):
        x = x_ref[...]                                     # (B, C, HW) — HW on lanes

        # ---- hoisted parameter loads (one slice per parameter, no reloads) ----
        def vec(name, rows):
            o = vec_off[name]
            return vec_ref[o:o + rows, :]                  # (rows, 1)

        def mat(name):
            o, r, c = mat_off[name]
            return mat_ref[o:o + r, 0:c]                   # (r, c)

        ln1_w, ln1_b = vec('ln1_w', C), vec('ln1_b', C)
        b1, b2 = vec('b1', DW), vec('b2', DW)
        b_sca, b3 = vec('b_sca', DW2), vec('b3', C)
        beta, gamma = vec('beta', C), vec('gamma', C)
        ln2_w, ln2_b = vec('ln2_w', C), vec('ln2_b', C)
        b4, b5 = vec('b4', FFN), vec('b5', C)
        w1, k2, w_sca = mat('w1'), mat('k2'), mat('w_sca')
        w3, w4, w5 = mat('w3'), mat('w4'), mat('w5')
        masks = mask_ref[...]                              # (8, HW), precomputed

        def layer_norm(v, w, b):
            # per-pixel norm over channels = sublane-axis reduction; rsqrt -> EUP
            mu = jnp.mean(v, axis=1, keepdims=True)        # (B, 1, HW)
            d = v - mu
            var = jnp.mean(d * d, axis=1, keepdims=True)
            return d * jax.lax.rsqrt(var + EPS) * w + b    # (C,1) broadcasts

        def conv1x1(v, w, b, cin, cout):
            # out[b, d, :] = sum_c w[d, c] * v[b, c, :] + bias[d]
            # exact-f32 VPU broadcast-FMAs (cin <= 8 at these sizes)
            acc = jnp.zeros((B, cout, HW), jnp.float32)
            for c in range(cin):
                acc = acc + w[:, c:c + 1] * v[:, c:c + 1, :]
            return acc + b

        def roll_lanes(v, shift):
            # lane rotation on the XLU; merge leading dims so roll stays 2-D
            ch = v.shape[1]
            return pltpu.roll(v.reshape(B * ch, HW), shift=shift,
                              axis=1).reshape(B, ch, HW)

        # ----- branch 1: norm1 -> conv1 -> dwconv 3x3 -> SG -> SCA -> conv3 -----
        t = layer_norm(x, ln1_w, ln1_b)                    # (B, C, HW)
        t = conv1x1(t, w1, b1, C, DW)                      # (B, DW, HW)

        # depthwise 3x3, padding=1, groups=DW: 9 lane-rolls + precomputed masks
        acc = jnp.zeros((B, DW, HW), jnp.float32)
        tap = 0
        for dh in range(3):
            for dw in range(3):
                s = (dh - 1) * W + (dw - 1)                # flat offset of this tap
                shifted = t if s == 0 else roll_lanes(t, (-s) % HW)
                if not (dh == 1 and dw == 1):
                    shifted = shifted * masks[tap:tap + 1, :]
                    tap += 1
                acc = acc + k2[:, dh * 3 + dw:dh * 3 + dw + 1] * shifted
        t = acc + b2                                       # (B, DW, HW)

        # SimpleGate (split along sublanes)
        g = t[:, :DW2, :] * t[:, DW2:, :]                  # (B, DW2, HW)

        # SCA: global average pool (lane reduce) + tiny 1x1, then channel scale
        pooled = jnp.mean(g, axis=2, keepdims=True)        # (B, DW2, 1)
        sca = jnp.zeros((B, DW2, 1), jnp.float32) + b_sca
        for c in range(DW2):
            sca = sca + w_sca[:, c:c + 1] * pooled[:, c:c + 1, :]
        g = g * sca

        t = conv1x1(g, w3, b3, DW2, C)                     # (B, C, HW)
        # dropout1 is Identity (drop_out_rate = 0.0)
        y = x + t * beta

        # ----- branch 2 (FFN): norm2 -> conv4 -> SG -> conv5 -----
        t = layer_norm(y, ln2_w, ln2_b)
        t = conv1x1(t, w4, b4, C, FFN)                     # (B, FFN, HW)
        t = t[:, :FFN2, :] * t[:, FFN2:, :]                # (B, FFN2, HW)
        t = conv1x1(t, w5, b5, FFN2, C)                    # (B, C, HW)
        # dropout2 is Identity (drop_out_rate = 0.0)
        out_ref[...] = y + t * gamma

    return kernel


# --------------------------------------------------------------------------
# wrapper
# --------------------------------------------------------------------------
def nafblock_pallas(x, params, images_per_step=None):
    """x: (N, C, H, W) NCHW float32; params in (Cout, Cin)/(C, 1) kernel layout."""
    N, C, H, W = x.shape
    HW = H * W
    assert HW % 128 == 0, "keep flattened H*W a multiple of 128 (pad host-side)"
    DW = params['w1'].shape[0]
    FFN = params['w4'].shape[0]

    if images_per_step is None:
        # Fill the 8 f32 sublanes with batch where possible (v5e/v6e win) while
        # keeping >= 2 parallel grid steps so both v7x TensorCores get work.
        b = max(1, 8 // C)
        while b > 1 and (N % b != 0 or N // b < 2):
            b -= 1
        images_per_step = b
    B = images_per_step
    assert N % B == 0

    vec_slab, vec_off = pack_vectors(params)               # (96, 1)
    mat_slab, mat_off = pack_matrices(params)               # (48, 16)
    mask_slab = build_edge_masks(H, W)                       # (8, HW)

    x2 = x.reshape(N, C, HW).astype(jnp.float32)             # contiguous: free relayout

    def const_spec(a):
        nd = a.ndim
        return pl.BlockSpec(a.shape, lambda n, _nd=nd: (0,) * _nd)

    out = pl.pallas_call(
        make_nafblock_kernel(H, W, C, DW, FFN, B, vec_off, mat_off),
        out_shape=jax.ShapeDtypeStruct((N, C, HW), jnp.float32),
        grid_spec=pltpu.PrefetchScalarGridSpec(
            num_scalar_prefetch=0,
            grid=(N // B,),
            in_specs=[pl.BlockSpec((B, C, HW), lambda n: (n, 0, 0)),
                      const_spec(vec_slab),
                      const_spec(mat_slab),
                      const_spec(mask_slab)],
            out_specs=pl.BlockSpec((B, C, HW), lambda n: (n, 0, 0)),
        ),
        compiler_params=pltpu.CompilerParams(
            dimension_semantics=("parallel",)),
    )(x2, vec_slab, mat_slab, mask_slab)
    return out.reshape(N, C, H, W)


# --------------------------------------------------------------------------
# pure-JAX reference (matches the PyTorch forward)
# --------------------------------------------------------------------------
def nafblock_ref(x, p):
    N, C, H, W = x.shape
    DW = p['w1'].shape[0]
    DW2 = DW // 2
    FFN = p['w4'].shape[0]
    FFN2 = FFN // 2
    hp = jax.lax.Precision.HIGHEST

    def ln(v, w, b):
        mu = v.mean(1, keepdims=True)
        var = ((v - mu) ** 2).mean(1, keepdims=True)
        return (v - mu) / jnp.sqrt(var + EPS) * w.reshape(1, C, 1, 1) + b.reshape(1, C, 1, 1)

    def c1x1(v, w, b):
        return jnp.einsum('nchw,dc->ndhw', v, w, precision=hp) + b.reshape(1, -1, 1, 1)

    t = ln(x, p['ln1_w'], p['ln1_b'])
    t = c1x1(t, p['w1'], p['b1'])
    pad = jnp.pad(t, ((0, 0), (0, 0), (1, 1), (1, 1)))
    acc = jnp.zeros_like(t)
    for dh in range(3):
        for dw in range(3):
            acc = acc + pad[:, :, dh:dh + H, dw:dw + W] * p['k2'][:, dh * 3 + dw].reshape(1, DW, 1, 1)
    t = acc + p['b2'].reshape(1, DW, 1, 1)
    g = t[:, :DW2] * t[:, DW2:]
    pooled = g.mean(axis=(2, 3), keepdims=True)
    sca = jnp.einsum('nchw,dc->ndhw', pooled, p['w_sca'], precision=hp) + p['b_sca'].reshape(1, DW2, 1, 1)
    g = g * sca
    t = c1x1(g, p['w3'], p['b3'])
    y = x + t * p['beta'].reshape(1, C, 1, 1)
    t = c1x1(ln(y, p['ln2_w'], p['ln2_b']), p['w4'], p['b4'])
    t = t[:, :FFN2] * t[:, FFN2:]
    t = c1x1(t, p['w5'], p['b5'])
    return y + t * p['gamma'].reshape(1, C, 1, 1)


def init_params(key, c, dw_expand=2, ffn_expand=2):
    dw = c * dw_expand
    dw2 = dw // 2
    ffn = c * ffn_expand
    ks = jax.random.split(key, 18)
    n = lambda k, s, sc: sc * jax.random.normal(k, s, jnp.float32)
    return {
        'ln1_w': 1.0 + n(ks[0], (c, 1), 0.1), 'ln1_b': n(ks[1], (c, 1), 0.1),
        'w1': n(ks[2], (dw, c), 0.3), 'b1': n(ks[3], (dw, 1), 0.1),
        'k2': n(ks[4], (dw, 9), 0.3), 'b2': n(ks[5], (dw, 1), 0.1),
        'w_sca': n(ks[6], (dw2, dw2), 0.3), 'b_sca': n(ks[7], (dw2, 1), 0.1),
        'w3': n(ks[8], (c, dw2), 0.3), 'b3': n(ks[9], (c, 1), 0.1),
        'beta': n(ks[10], (c, 1), 0.5), 'gamma': n(ks[11], (c, 1), 0.5),
        'ln2_w': 1.0 + n(ks[12], (c, 1), 0.1), 'ln2_b': n(ks[13], (c, 1), 0.1),
        'w4': n(ks[14], (ffn, c), 0.3), 'b4': n(ks[15], (ffn, 1), 0.1),
        'w5': n(ks[16], (c, ffn // 2), 0.3), 'b5': n(ks[17], (c, 1), 0.1),
    }


if __name__ == "__main__":
    key = jax.random.PRNGKey(0)
    kx, kp, kx4 = jax.random.split(key, 3)

    C, H, W = 4, 16, 16
    params = init_params(kp, C)

    # Path 1 (module spec shape): N=2 -> B=1, grid=(2,) parallel (keeps both v7x TCs busy)
    x = jax.random.normal(kx, (2, C, H, W), jnp.float32)
    out = jax.block_until_ready(nafblock_pallas(x, params))
    ref = jax.block_until_ready(nafblock_ref(x, params))
    np.testing.assert_allclose(np.asarray(out), np.asarray(ref), rtol=1e-4, atol=1e-5)
    assert out.shape == (2, C, H, W) and out.dtype == jnp.float32

    # Path 2 (batch-on-sublanes): N=4 -> B=2 images/block fill all 8 f32 sublanes, grid=(2,)
    x4 = jax.random.normal(kx4, (4, C, H, W), jnp.float32)
    out4 = jax.block_until_ready(nafblock_pallas(x4, params))
    ref4 = jax.block_until_ready(nafblock_ref(x4, params))
    np.testing.assert_allclose(np.asarray(out4), np.asarray(ref4), rtol=1e-4, atol=1e-5)

    print("KERNEL_OK")
</pallas_src>

<mosaic_0001>
module attributes {stable_mosaic.version = 11 : i64} {
  func.func @kernel(%arg0: i32, %arg1: memref<1x4x256xf32, #tpu.memory_space<vmem>>, %arg2: memref<96x1xf32, #tpu.memory_space<vmem>>, %arg3: memref<48x16xf32, #tpu.memory_space<vmem>>, %arg4: memref<8x256xf32, #tpu.memory_space<vmem>>, %arg5: memref<1x4x256xf32, #tpu.memory_space<vmem>>) attributes {dimension_semantics = [#tpu.dimension_semantics<parallel>], iteration_bounds = array<i64: 2>, scalar_prefetch = 0 : i64, scratch_operands = 0 : i64, tpu.core_type = #tpu.core_type<tc>, window_params = [{transform_indices = @transform_0, window_bounds = array<i64: 1, 4, 256>}, {pipeline_mode = #tpu.pipeline_mode<synchronous>, transform_indices = @transform_1, window_bounds = array<i64: 96, 1>}, {pipeline_mode = #tpu.pipeline_mode<synchronous>, transform_indices = @transform_2, window_bounds = array<i64: 48, 16>}, {pipeline_mode = #tpu.pipeline_mode<synchronous>, transform_indices = @transform_3, window_bounds = array<i64: 8, 256>}, {transform_indices = @transform_4, window_bounds = array<i64: 1, 4, 256>}]} {
    %c0 = arith.constant 0 : index
    %c0_0 = arith.constant 0 : index
    %c0_1 = arith.constant 0 : index
    %0 = vector.load %arg1[%c0, %c0_0, %c0_1] : memref<1x4x256xf32, #tpu.memory_space<vmem>>, vector<1x4x256xf32>
    %c0_2 = arith.constant 0 : index
    %c0_3 = arith.constant 0 : index
    %1 = vector.load %arg2[%c0_2, %c0_3] : memref<96x1xf32, #tpu.memory_space<vmem>>, vector<4x1xf32>
    %c8 = arith.constant 8 : index
    %c0_4 = arith.constant 0 : index
    %2 = vector.load %arg2[%c8, %c0_4] : memref<96x1xf32, #tpu.memory_space<vmem>>, vector<4x1xf32>
    %c16 = arith.constant 16 : index
    %c0_5 = arith.constant 0 : index
    %3 = vector.load %arg2[%c16, %c0_5] : memref<96x1xf32, #tpu.memory_space<vmem>>, vector<8x1xf32>
    %c24 = arith.constant 24 : index
    %c0_6 = arith.constant 0 : index
    %4 = vector.load %arg2[%c24, %c0_6] : memref<96x1xf32, #tpu.memory_space<vmem>>, vector<8x1xf32>
    %c32 = arith.constant 32 : index
    %c0_7 = arith.constant 0 : index
    %5 = vector.load %arg2[%c32, %c0_7] : memref<96x1xf32, #tpu.memory_space<vmem>>, vector<4x1xf32>
    %c40 = arith.constant 40 : index
    %c0_8 = arith.constant 0 : index
    %6 = vector.load %arg2[%c40, %c0_8] : memref<96x1xf32, #tpu.memory_space<vmem>>, vector<4x1xf32>
    %c48 = arith.constant 48 : index
    %c0_9 = arith.constant 0 : index
    %7 = vector.load %arg2[%c48, %c0_9] : memref<96x1xf32, #tpu.memory_space<vmem>>, vector<4x1xf32>
    %c56 = arith.constant 56 : index
    %c0_10 = arith.constant 0 : index
    %8 = vector.load %arg2[%c56, %c0_10] : memref<96x1xf32, #tpu.memory_space<vmem>>, vector<4x1xf32>
    %c64 = arith.constant 64 : index
    %c0_11 = arith.constant 0 : index
    %9 = vector.load %arg2[%c64, %c0_11] : memref<96x1xf32, #tpu.memory_space<vmem>>, vector<4x1xf32>
    %c72 = arith.constant 72 : index
    %c0_12 = arith.constant 0 : index
    %10 = vector.load %arg2[%c72, %c0_12] : memref<96x1xf32, #tpu.memory_space<vmem>>, vector<4x1xf32>
    %c80 = arith.constant 80 : index
    %c0_13 = arith.constant 0 : index
    %11 = vector.load %arg2[%c80, %c0_13] : memref<96x1xf32, #tpu.memory_space<vmem>>, vector<8x1xf32>
    %c88 = arith.constant 88 : index
    %c0_14 = arith.constant 0 : index
    %12 = vector.load %arg2[%c88, %c0_14] : memref<96x1xf32, #tpu.memory_space<vmem>>, vector<4x1xf32>
    %c0_15 = arith.constant 0 : index
    %c0_16 = arith.constant 0 : index
    %13 = vector.load %arg3[%c0_15, %c0_16] : memref<48x16xf32, #tpu.memory_space<vmem>>, vector<8x4xf32>
    %c8_17 = arith.constant 8 : index
    %c0_18 = arith.constant 0 : index
    %14 = vector.load %arg3[%c8_17, %c0_18] : memref<48x16xf32, #tpu.memory_space<vmem>>, vector<8x9xf32>
    %c16_19 = arith.constant 16 : index
    %c0_20 = arith.constant 0 : index
    %15 = vector.load %arg3[%c16_19, %c0_20] : memref<48x16xf32, #tpu.memory_space<vmem>>, vector<4x4xf32>
    %c24_21 = arith.constant 24 : index
    %c0_22 = arith.constant 0 : index
    %16 = vector.load %arg3[%c24_21, %c0_22] : memref<48x16xf32, #tpu.memory_space<vmem>>, vector<4x4xf32>
    %c32_23 = arith.constant 32 : index
    %c0_24 = arith.constant 0 : index
    %17 = vector.load %arg3[%c32_23, %c0_24] : memref<48x16xf32, #tpu.memory_space<vmem>>, vector<8x4xf32>
    %c40_25 = arith.constant 40 : index
    %c0_26 = arith.constant 0 : index
    %18 = vector.load %arg3[%c40_25, %c0_26] : memref<48x16xf32, #tpu.memory_space<vmem>>, vector<4x4xf32>
    %c0_27 = arith.constant 0 : index
    %c0_28 = arith.constant 0 : index
    %19 = vector.load %arg4[%c0_27, %c0_28] : memref<8x256xf32, #tpu.memory_space<vmem>>, vector<8x256xf32>
    %cst = arith.constant dense<0.000000e+00> : vector<1x256xf32>
    %20 = vector.multi_reduction <add>, %0, %cst [1] : vector<1x4x256xf32> to vector<1x256xf32>
    %21 = vector.shape_cast %20 : vector<1x256xf32> to vector<1x1x256xf32>
    %cst_29 = arith.constant 4.000000e+00 : f32
    %22 = vector.broadcast %cst_29 : f32 to vector<1x1x256xf32>
    %23 = arith.divf %21, %22 : vector<1x1x256xf32>
    %24 = vector.broadcast %23 : vector<1x1x256xf32> to vector<1x4x256xf32>
    %25 = arith.subf %0, %24 : vector<1x4x256xf32>
    %26 = arith.mulf %25, %25 : vector<1x4x256xf32>
    %cst_30 = arith.constant dense<0.000000e+00> : vector<1x256xf32>
    %27 = vector.multi_reduction <add>, %26, %cst_30 [1] : vector<1x4x256xf32> to vector<1x256xf32>
    %28 = vector.shape_cast %27 : vector<1x256xf32> to vector<1x1x256xf32>
    %cst_31 = arith.constant 4.000000e+00 : f32
    %29 = vector.broadcast %cst_31 : f32 to vector<1x1x256xf32>
    %30 = arith.divf %28, %29 : vector<1x1x256xf32>
    %cst_32 = arith.constant 9.99999997E-7 : f32
    %31 = vector.broadcast %cst_32 : f32 to vector<1x1x256xf32>
    %32 = arith.addf %30, %31 : vector<1x1x256xf32>
    %33 = math.rsqrt %32 : vector<1x1x256xf32>
    %34 = vector.broadcast %33 : vector<1x1x256xf32> to vector<1x4x256xf32>
    %35 = arith.mulf %25, %34 : vector<1x4x256xf32>
    %36 = vector.shape_cast %1 : vector<4x1xf32> to vector<1x4x1xf32>
    %37 = vector.broadcast %36 : vector<1x4x1xf32> to vector<1x4x256xf32>
    %38 = arith.mulf %35, %37 : vector<1x4x256xf32>
    %39 = vector.shape_cast %2 : vector<4x1xf32> to vector<1x4x1xf32>
    %40 = vector.broadcast %39 : vector<1x4x1xf32> to vector<1x4x256xf32>
    %41 = arith.addf %38, %40 : vector<1x4x256xf32>
    %cst_33 = arith.constant 0.000000e+00 : f32
    %42 = vector.broadcast %cst_33 : f32 to vector<1x8x256xf32>
    %43 = vector.extract_strided_slice %13 {offsets = [0, 0], sizes = [8, 1], strides = [1, 1]} : vector<8x4xf32> to vector<8x1xf32>
    %44 = vector.extract_strided_slice %41 {offsets = [0, 0, 0], sizes = [1, 1, 256], strides = [1, 1, 1]} : vector<1x4x256xf32> to vector<1x1x256xf32>
    %45 = vector.shape_cast %43 : vector<8x1xf32> to vector<1x8x1xf32>
    %46 = vector.broadcast %45 : vector<1x8x1xf32> to vector<1x8x256xf32>
    %47 = vector.broadcast %44 : vector<1x1x256xf32> to vector<1x8x256xf32>
    %48 = arith.mulf %46, %47 : vector<1x8x256xf32>
    %49 = arith.addf %42, %48 : vector<1x8x256xf32>
    %50 = vector.extract_strided_slice %13 {offsets = [0, 1], sizes = [8, 1], strides = [1, 1]} : vector<8x4xf32> to vector<8x1xf32>
    %51 = vector.extract_strided_slice %41 {offsets = [0, 1, 0], sizes = [1, 1, 256], strides = [1, 1, 1]} : vector<1x4x256xf32> to vector<1x1x256xf32>
    %52 = vector.shape_cast %50 : vector<8x1xf32> to vector<1x8x1xf32>
    %53 = vector.broadcast %52 : vector<1x8x1xf32> to vector<1x8x256xf32>
    %54 = vector.broadcast %51 : vector<1x1x256xf32> to vector<1x8x256xf32>
    %55 = arith.mulf %53, %54 : vector<1x8x256xf32>
    %56 = arith.addf %49, %55 : vector<1x8x256xf32>
    %57 = vector.extract_strided_slice %13 {offsets = [0, 2], sizes = [8, 1], strides = [1, 1]} : vector<8x4xf32> to vector<8x1xf32>
    %58 = vector.extract_strided_slice %41 {offsets = [0, 2, 0], sizes = [1, 1, 256], strides = [1, 1, 1]} : vector<1x4x256xf32> to vector<1x1x256xf32>
    %59 = vector.shape_cast %57 : vector<8x1xf32> to vector<1x8x1xf32>
    %60 = vector.broadcast %59 : vector<1x8x1xf32> to vector<1x8x256xf32>
    %61 = vector.broadcast %58 : vector<1x1x256xf32> to vector<1x8x256xf32>
    %62 = arith.mulf %60, %61 : vector<1x8x256xf32>
    %63 = arith.addf %56, %62 : vector<1x8x256xf32>
    %64 = vector.extract_strided_slice %13 {offsets = [0, 3], sizes = [8, 1], strides = [1, 1]} : vector<8x4xf32> to vector<8x1xf32>
    %65 = vector.extract_strided_slice %41 {offsets = [0, 3, 0], sizes = [1, 1, 256], strides = [1, 1, 1]} : vector<1x4x256xf32> to vector<1x1x256xf32>
    %66 = vector.shape_cast %64 : vector<8x1xf32> to vector<1x8x1xf32>
    %67 = vector.broadcast %66 : vector<1x8x1xf32> to vector<1x8x256xf32>
    %68 = vector.broadcast %65 : vector<1x1x256xf32> to vector<1x8x256xf32>
    %69 = arith.mulf %67, %68 : vector<1x8x256xf32>
    %70 = arith.addf %63, %69 : vector<1x8x256xf32>
    %71 = vector.shape_cast %3 : vector<8x1xf32> to vector<1x8x1xf32>
    %72 = vector.broadcast %71 : vector<1x8x1xf32> to vector<1x8x256xf32>
    %73 = arith.addf %70, %72 : vector<1x8x256xf32>
    %cst_34 = arith.constant 0.000000e+00 : f32
    %74 = vector.broadcast %cst_34 : f32 to vector<1x8x256xf32>
    %75 = vector.shape_cast %73 : vector<1x8x256xf32> to vector<8x256xf32>
    %c17_i32 = arith.constant 17 : i32
    %76 = tpu.dynamic_rotate %75 by %c17_i32 dim 1 : vector<8x256xf32>, i32 -> vector<8x256xf32>
    %77 = vector.shape_cast %76 : vector<8x256xf32> to vector<1x8x256xf32>
    %78 = vector.extract_strided_slice %19 {offsets = [0, 0], sizes = [1, 256], strides = [1, 1]} : vector<8x256xf32> to vector<1x256xf32>
    %79 = vector.shape_cast %78 : vector<1x256xf32> to vector<1x1x256xf32>
    %80 = vector.broadcast %79 : vector<1x1x256xf32> to vector<1x8x256xf32>
    %81 = arith.mulf %77, %80 : vector<1x8x256xf32>
    %82 = vector.extract_strided_slice %14 {offsets = [0, 0], sizes = [8, 1], strides = [1, 1]} : vector<8x9xf32> to vector<8x1xf32>
    %83 = vector.shape_cast %82 : vector<8x1xf32> to vector<1x8x1xf32>
    %84 = vector.broadcast %83 : vector<1x8x1xf32> to vector<1x8x256xf32>
    %85 = arith.mulf %84, %81 : vector<1x8x256xf32>
    %86 = arith.addf %74, %85 : vector<1x8x256xf32>
    %87 = vector.shape_cast %73 : vector<1x8x256xf32> to vector<8x256xf32>
    %c16_i32 = arith.constant 16 : i32
    %88 = tpu.dynamic_rotate %87 by %c16_i32 dim 1 : vector<8x256xf32>, i32 -> vector<8x256xf32>
    %89 = vector.shape_cast %88 : vector<8x256xf32> to vector<1x8x256xf32>
    %90 = vector.extract_strided_slice %19 {offsets = [1, 0], sizes = [1, 256], strides = [1, 1]} : vector<8x256xf32> to vector<1x256xf32>
    %91 = vector.shape_cast %90 : vector<1x256xf32> to vector<1x1x256xf32>
    %92 = vector.broadcast %91 : vector<1x1x256xf32> to vector<1x8x256xf32>
    %93 = arith.mulf %89, %92 : vector<1x8x256xf32>
    %94 = vector.extract_strided_slice %14 {offsets = [0, 1], sizes = [8, 1], strides = [1, 1]} : vector<8x9xf32> to vector<8x1xf32>
    %95 = vector.shape_cast %94 : vector<8x1xf32> to vector<1x8x1xf32>
    %96 = vector.broadcast %95 : vector<1x8x1xf32> to vector<1x8x256xf32>
    %97 = arith.mulf %96, %93 : vector<1x8x256xf32>
    %98 = arith.addf %86, %97 : vector<1x8x256xf32>
    %99 = vector.shape_cast %73 : vector<1x8x256xf32> to vector<8x256xf32>
    %c15_i32 = arith.constant 15 : i32
    %100 = tpu.dynamic_rotate %99 by %c15_i32 dim 1 : vector<8x256xf32>, i32 -> vector<8x256xf32>
    %101 = vector.shape_cast %100 : vector<8x256xf32> to vector<1x8x256xf32>
    %102 = vector.extract_strided_slice %19 {offsets = [2, 0], sizes = [1, 256], strides = [1, 1]} : vector<8x256xf32> to vector<1x256xf32>
    %103 = vector.shape_cast %102 : vector<1x256xf32> to vector<1x1x256xf32>
    %104 = vector.broadcast %103 : vector<1x1x256xf32> to vector<1x8x256xf32>
    %105 = arith.mulf %101, %104 : vector<1x8x256xf32>
    %106 = vector.extract_strided_slice %14 {offsets = [0, 2], sizes = [8, 1], strides = [1, 1]} : vector<8x9xf32> to vector<8x1xf32>
    %107 = vector.shape_cast %106 : vector<8x1xf32> to vector<1x8x1xf32>
    %108 = vector.broadcast %107 : vector<1x8x1xf32> to vector<1x8x256xf32>
    %109 = arith.mulf %108, %105 : vector<1x8x256xf32>
    %110 = arith.addf %98, %109 : vector<1x8x256xf32>
    %111 = vector.shape_cast %73 : vector<1x8x256xf32> to vector<8x256xf32>
    %c1_i32 = arith.constant 1 : i32
    %112 = tpu.dynamic_rotate %111 by %c1_i32 dim 1 : vector<8x256xf32>, i32 -> vector<8x256xf32>
    %113 = vector.shape_cast %112 : vector<8x256xf32> to vector<1x8x256xf32>
    %114 = vector.extract_strided_slice %19 {offsets = [3, 0], sizes = [1, 256], strides = [1, 1]} : vector<8x256xf32> to vector<1x256xf32>
    %115 = vector.shape_cast %114 : vector<1x256xf32> to vector<1x1x256xf32>
    %116 = vector.broadcast %115 : vector<1x1x256xf32> to vector<1x8x256xf32>
    %117 = arith.mulf %113, %116 : vector<1x8x256xf32>
    %118 = vector.extract_strided_slice %14 {offsets = [0, 3], sizes = [8, 1], strides = [1, 1]} : vector<8x9xf32> to vector<8x1xf32>
    %119 = vector.shape_cast %118 : vector<8x1xf32> to vector<1x8x1xf32>
    %120 = vector.broadcast %119 : vector<1x8x1xf32> to vector<1x8x256xf32>
    %121 = arith.mulf %120, %117 : vector<1x8x256xf32>
    %122 = arith.addf %110, %121 : vector<1x8x256xf32>
    %123 = vector.extract_strided_slice %14 {offsets = [0, 4], sizes = [8, 1], strides = [1, 1]} : vector<8x9xf32> to vector<8x1xf32>
    %124 = vector.shape_cast %123 : vector<8x1xf32> to vector<1x8x1xf32>
    %125 = vector.broadcast %124 : vector<1x8x1xf32> to vector<1x8x256xf32>
    %126 = arith.mulf %125, %73 : vector<1x8x256xf32>
    %127 = arith.addf %122, %126 : vector<1x8x256xf32>
    %128 = vector.shape_cast %73 : vector<1x8x256xf32> to vector<8x256xf32>
    %c255_i32 = arith.constant 255 : i32
    %129 = tpu.dynamic_rotate %128 by %c255_i32 dim 1 : vector<8x256xf32>, i32 -> vector<8x256xf32>
    %130 = vector.shape_cast %129 : vector<8x256xf32> to vector<1x8x256xf32>
    %131 = vector.extract_strided_slice %19 {offsets = [4, 0], sizes = [1, 256], strides = [1, 1]} : vector<8x256xf32> to vector<1x256xf32>
    %132 = vector.shape_cast %131 : vector<1x256xf32> to vector<1x1x256xf32>
    %133 = vector.broadcast %132 : vector<1x1x256xf32> to vector<1x8x256xf32>
    %134 = arith.mulf %130, %133 : vector<1x8x256xf32>
    %135 = vector.extract_strided_slice %14 {offsets = [0, 5], sizes = [8, 1], strides = [1, 1]} : vector<8x9xf32> to vector<8x1xf32>
    %136 = vector.shape_cast %135 : vector<8x1xf32> to vector<1x8x1xf32>
    %137 = vector.broadcast %136 : vector<1x8x1xf32> to vector<1x8x256xf32>
    %138 = arith.mulf %137, %134 : vector<1x8x256xf32>
    %139 = arith.addf %127, %138 : vector<1x8x256xf32>
    %140 = vector.shape_cast %73 : vector<1x8x256xf32> to vector<8x256xf32>
    %c241_i32 = arith.constant 241 : i32
    %141 = tpu.dynamic_rotate %140 by %c241_i32 dim 1 : vector<8x256xf32>, i32 -> vector<8x256xf32>
    %142 = vector.shape_cast %141 : vector<8x256xf32> to vector<1x8x256xf32>
    %143 = vector.extract_strided_slice %19 {offsets = [5, 0], sizes = [1, 256], strides = [1, 1]} : vector<8x256xf32> to vector<1x256xf32>
    %144 = vector.shape_cast %143 : vector<1x256xf32> to vector<1x1x256xf32>
    %145 = vector.broadcast %144 : vector<1x1x256xf32> to vector<1x8x256xf32>
    %146 = arith.mulf %142, %145 : vector<1x8x256xf32>
    %147 = vector.extract_strided_slice %14 {offsets = [0, 6], sizes = [8, 1], strides = [1, 1]} : vector<8x9xf32> to vector<8x1xf32>
    %148 = vector.shape_cast %147 : vector<8x1xf32> to vector<1x8x1xf32>
    %149 = vector.broadcast %148 : vector<1x8x1xf32> to vector<1x8x256xf32>
    %150 = arith.mulf %149, %146 : vector<1x8x256xf32>
    %151 = arith.addf %139, %150 : vector<1x8x256xf32>
    %152 = vector.shape_cast %73 : vector<1x8x256xf32> to vector<8x256xf32>
    %c240_i32 = arith.constant 240 : i32
    %153 = tpu.dynamic_rotate %152 by %c240_i32 dim 1 : vector<8x256xf32>, i32 -> vector<8x256xf32>
    %154 = vector.shape_cast %153 : vector<8x256xf32> to vector<1x8x256xf32>
    %155 = vector.extract_strided_slice %19 {offsets = [6, 0], sizes = [1, 256], strides = [1, 1]} : vector<8x256xf32> to vector<1x256xf32>
    %156 = vector.shape_cast %155 : vector<1x256xf32> to vector<1x1x256xf32>
    %157 = vector.broadcast %156 : vector<1x1x256xf32> to vector<1x8x256xf32>
    %158 = arith.mulf %154, %157 : vector<1x8x256xf32>
    %159 = vector.extract_strided_slice %14 {offsets = [0, 7], sizes = [8, 1], strides = [1, 1]} : vector<8x9xf32> to vector<8x1xf32>
    %160 = vector.shape_cast %159 : vector<8x1xf32> to vector<1x8x1xf32>
    %161 = vector.broadcast %160 : vector<1x8x1xf32> to vector<1x8x256xf32>
    %162 = arith.mulf %161, %158 : vector<1x8x256xf32>
    %163 = arith.addf %151, %162 : vector<1x8x256xf32>
    %164 = vector.shape_cast %73 : vector<1x8x256xf32> to vector<8x256xf32>
    %c239_i32 = arith.constant 239 : i32
    %165 = tpu.dynamic_rotate %164 by %c239_i32 dim 1 : vector<8x256xf32>, i32 -> vector<8x256xf32>
    %166 = vector.shape_cast %165 : vector<8x256xf32> to vector<1x8x256xf32>
    %167 = vector.extract_strided_slice %19 {offsets = [7, 0], sizes = [1, 256], strides = [1, 1]} : vector<8x256xf32> to vector<1x256xf32>
    %168 = vector.shape_cast %167 : vector<1x256xf32> to vector<1x1x256xf32>
    %169 = vector.broadcast %168 : vector<1x1x256xf32> to vector<1x8x256xf32>
    %170 = arith.mulf %166, %169 : vector<1x8x256xf32>
    %171 = vector.extract_strided_slice %14 {offsets = [0, 8], sizes = [8, 1], strides = [1, 1]} : vector<8x9xf32> to vector<8x1xf32>
    %172 = vector.shape_cast %171 : vector<8x1xf32> to vector<1x8x1xf32>
    %173 = vector.broadcast %172 : vector<1x8x1xf32> to vector<1x8x256xf32>
    %174 = arith.mulf %173, %170 : vector<1x8x256xf32>
    %175 = arith.addf %163, %174 : vector<1x8x256xf32>
    %176 = vector.shape_cast %4 : vector<8x1xf32> to vector<1x8x1xf32>
    %177 = vector.broadcast %176 : vector<1x8x1xf32> to vector<1x8x256xf32>
    %178 = arith.addf %175, %177 : vector<1x8x256xf32>
    %179 = vector.extract_strided_slice %178 {offsets = [0, 0, 0], sizes = [1, 4, 256], strides = [1, 1, 1]} : vector<1x8x256xf32> to vector<1x4x256xf32>
    %180 = vector.extract_strided_slice %178 {offsets = [0, 4, 0], sizes = [1, 4, 256], strides = [1, 1, 1]} : vector<1x8x256xf32> to vector<1x4x256xf32>
    %181 = arith.mulf %179, %180 : vector<1x4x256xf32>
    %cst_35 = arith.constant dense<0.000000e+00> : vector<1x4xf32>
    %182 = vector.multi_reduction <add>, %181, %cst_35 [2] : vector<1x4x256xf32> to vector<1x4xf32>
    %183 = vector.shape_cast %182 : vector<1x4xf32> to vector<1x4x1xf32>
    %cst_36 = arith.constant 2.560000e+02 : f32
    %184 = vector.broadcast %cst_36 : f32 to vector<1x4x1xf32>
    %185 = arith.divf %183, %184 : vector<1x4x1xf32>
    %cst_37 = arith.constant 0.000000e+00 : f32
    %186 = vector.broadcast %cst_37 : f32 to vector<1x4x1xf32>
    %187 = vector.shape_cast %5 : vector<4x1xf32> to vector<1x4x1xf32>
    %188 = arith.addf %186, %187 : vector<1x4x1xf32>
    %189 = vector.extract_strided_slice %15 {offsets = [0, 0], sizes = [4, 1], strides = [1, 1]} : vector<4x4xf32> to vector<4x1xf32>
    %190 = vector.extract_strided_slice %185 {offsets = [0, 0, 0], sizes = [1, 1, 1], strides = [1, 1, 1]} : vector<1x4x1xf32> to vector<1x1x1xf32>
    %191 = vector.shape_cast %189 : vector<4x1xf32> to vector<1x4x1xf32>
    %192 = vector.broadcast %190 : vector<1x1x1xf32> to vector<1x4x1xf32>
    %193 = arith.mulf %191, %192 : vector<1x4x1xf32>
    %194 = arith.addf %188, %193 : vector<1x4x1xf32>
    %195 = vector.extract_strided_slice %15 {offsets = [0, 1], sizes = [4, 1], strides = [1, 1]} : vector<4x4xf32> to vector<4x1xf32>
    %196 = vector.extract_strided_slice %185 {offsets = [0, 1, 0], sizes = [1, 1, 1], strides = [1, 1, 1]} : vector<1x4x1xf32> to vector<1x1x1xf32>
    %197 = vector.shape_cast %195 : vector<4x1xf32> to vector<1x4x1xf32>
    %198 = vector.broadcast %196 : vector<1x1x1xf32> to vector<1x4x1xf32>
    %199 = arith.mulf %197, %198 : vector<1x4x1xf32>
    %200 = arith.addf %194, %199 : vector<1x4x1xf32>
    %201 = vector.extract_strided_slice %15 {offsets = [0, 2], sizes = [4, 1], strides = [1, 1]} : vector<4x4xf32> to vector<4x1xf32>
    %202 = vector.extract_strided_slice %185 {offsets = [0, 2, 0], sizes = [1, 1, 1], strides = [1, 1, 1]} : vector<1x4x1xf32> to vector<1x1x1xf32>
    %203 = vector.shape_cast %201 : vector<4x1xf32> to vector<1x4x1xf32>
    %204 = vector.broadcast %202 : vector<1x1x1xf32> to vector<1x4x1xf32>
    %205 = arith.mulf %203, %204 : vector<1x4x1xf32>
    %206 = arith.addf %200, %205 : vector<1x4x1xf32>
    %207 = vector.extract_strided_slice %15 {offsets = [0, 3], sizes = [4, 1], strides = [1, 1]} : vector<4x4xf32> to vector<4x1xf32>
    %208 = vector.extract_strided_slice %185 {offsets = [0, 3, 0], sizes = [1, 1, 1], strides = [1, 1, 1]} : vector<1x4x1xf32> to vector<1x1x1xf32>
    %209 = vector.shape_cast %207 : vector<4x1xf32> to vector<1x4x1xf32>
    %210 = vector.broadcast %208 : vector<1x1x1xf32> to vector<1x4x1xf32>
    %211 = arith.mulf %209, %210 : vector<1x4x1xf32>
    %212 = arith.addf %206, %211 : vector<1x4x1xf32>
    %213 = vector.broadcast %212 : vector<1x4x1xf32> to vector<1x4x256xf32>
    %214 = arith.mulf %181, %213 : vector<1x4x256xf32>
    %cst_38 = arith.constant 0.000000e+00 : f32
    %215 = vector.broadcast %cst_38 : f32 to vector<1x4x256xf32>
    %216 = vector.extract_strided_slice %16 {offsets = [0, 0], sizes = [4, 1], strides = [1, 1]} : vector<4x4xf32> to vector<4x1xf32>
    %217 = vector.extract_strided_slice %214 {offsets = [0, 0, 0], sizes = [1, 1, 256], strides = [1, 1, 1]} : vector<1x4x256xf32> to vector<1x1x256xf32>
    %218 = vector.shape_cast %216 : vector<4x1xf32> to vector<1x4x1xf32>
    %219 = vector.broadcast %218 : vector<1x4x1xf32> to vector<1x4x256xf32>
    %220 = vector.broadcast %217 : vector<1x1x256xf32> to vector<1x4x256xf32>
    %221 = arith.mulf %219, %220 : vector<1x4x256xf32>
    %222 = arith.addf %215, %221 : vector<1x4x256xf32>
    %223 = vector.extract_strided_slice %16 {offsets = [0, 1], sizes = [4, 1], strides = [1, 1]} : vector<4x4xf32> to vector<4x1xf32>
    %224 = vector.extract_strided_slice %214 {offsets = [0, 1, 0], sizes = [1, 1, 256], strides = [1, 1, 1]} : vector<1x4x256xf32> to vector<1x1x256xf32>
    %225 = vector.shape_cast %223 : vector<4x1xf32> to vector<1x4x1xf32>
    %226 = vector.broadcast %225 : vector<1x4x1xf32> to vector<1x4x256xf32>
    %227 = vector.broadcast %224 : vector<1x1x256xf32> to vector<1x4x256xf32>
    %228 = arith.mulf %226, %227 : vector<1x4x256xf32>
    %229 = arith.addf %222, %228 : vector<1x4x256xf32>
    %230 = vector.extract_strided_slice %16 {offsets = [0, 2], sizes = [4, 1], strides = [1, 1]} : vector<4x4xf32> to vector<4x1xf32>
    %231 = vector.extract_strided_slice %214 {offsets = [0, 2, 0], sizes = [1, 1, 256], strides = [1, 1, 1]} : vector<1x4x256xf32> to vector<1x1x256xf32>
    %232 = vector.shape_cast %230 : vector<4x1xf32> to vector<1x4x1xf32>
    %233 = vector.broadcast %232 : vector<1x4x1xf32> to vector<1x4x256xf32>
    %234 = vector.broadcast %231 : vector<1x1x256xf32> to vector<1x4x256xf32>
    %235 = arith.mulf %233, %234 : vector<1x4x256xf32>
    %236 = arith.addf %229, %235 : vector<1x4x256xf32>
    %237 = vector.extract_strided_slice %16 {offsets = [0, 3], sizes = [4, 1], strides = [1, 1]} : vector<4x4xf32> to vector<4x1xf32>
    %238 = vector.extract_strided_slice %214 {offsets = [0, 3, 0], sizes = [1, 1, 256], strides = [1, 1, 1]} : vector<1x4x256xf32> to vector<1x1x256xf32>
    %239 = vector.shape_cast %237 : vector<4x1xf32> to vector<1x4x1xf32>
    %240 = vector.broadcast %239 : vector<1x4x1xf32> to vector<1x4x256xf32>
    %241 = vector.broadcast %238 : vector<1x1x256xf32> to vector<1x4x256xf32>
    %242 = arith.mulf %240, %241 : vector<1x4x256xf32>
    %243 = arith.addf %236, %242 : vector<1x4x256xf32>
    %244 = vector.shape_cast %6 : vector<4x1xf32> to vector<1x4x1xf32>
    %245 = vector.broadcast %244 : vector<1x4x1xf32> to vector<1x4x256xf32>
    %246 = arith.addf %243, %245 : vector<1x4x256xf32>
    %247 = vector.shape_cast %7 : vector<4x1xf32> to vector<1x4x1xf32>
    %248 = vector.broadcast %247 : vector<1x4x1xf32> to vector<1x4x256xf32>
    %249 = arith.mulf %246, %248 : vector<1x4x256xf32>
    %250 = arith.addf %0, %249 : vector<1x4x256xf32>
    %cst_39 = arith.constant dense<0.000000e+00> : vector<1x256xf32>
    %251 = vector.multi_reduction <add>, %250, %cst_39 [1] : vector<1x4x256xf32> to vector<1x256xf32>
    %252 = vector.shape_cast %251 : vector<1x256xf32> to vector<1x1x256xf32>
    %cst_40 = arith.constant 4.000000e+00 : f32
    %253 = vector.broadcast %cst_40 : f32 to vector<1x1x256xf32>
    %254 = arith.divf %252, %253 : vector<1x1x256xf32>
    %255 = vector.broadcast %254 : vector<1x1x256xf32> to vector<1x4x256xf32>
    %256 = arith.subf %250, %255 : vector<1x4x256xf32>
    %257 = arith.mulf %256, %256 : vector<1x4x256xf32>
    %cst_41 = arith.constant dense<0.000000e+00> : vector<1x256xf32>
    %258 = vector.multi_reduction <add>, %257, %cst_41 [1] : vector<1x4x256xf32> to vector<1x256xf32>
    %259 = vector.shape_cast %258 : vector<1x256xf32> to vector<1x1x256xf32>
    %cst_42 = arith.constant 4.000000e+00 : f32
    %260 = vector.broadcast %cst_42 : f32 to vector<1x1x256xf32>
    %261 = arith.divf %259, %260 : vector<1x1x256xf32>
    %cst_43 = arith.constant 9.99999997E-7 : f32
    %262 = vector.broadcast %cst_43 : f32 to vector<1x1x256xf32>
    %263 = arith.addf %261, %262 : vector<1x1x256xf32>
    %264 = math.rsqrt %263 : vector<1x1x256xf32>
    %265 = vector.broadcast %264 : vector<1x1x256xf32> to vector<1x4x256xf32>
    %266 = arith.mulf %256, %265 : vector<1x4x256xf32>
    %267 = vector.shape_cast %9 : vector<4x1xf32> to vector<1x4x1xf32>
    %268 = vector.broadcast %267 : vector<1x4x1xf32> to vector<1x4x256xf32>
    %269 = arith.mulf %266, %268 : vector<1x4x256xf32>
    %270 = vector.shape_cast %10 : vector<4x1xf32> to vector<1x4x1xf32>
    %271 = vector.broadcast %270 : vector<1x4x1xf32> to vector<1x4x256xf32>
    %272 = arith.addf %269, %271 : vector<1x4x256xf32>
    %cst_44 = arith.constant 0.000000e+00 : f32
    %273 = vector.broadcast %cst_44 : f32 to vector<1x8x256xf32>
    %274 = vector.extract_strided_slice %17 {offsets = [0, 0], sizes = [8, 1], strides = [1, 1]} : vector<8x4xf32> to vector<8x1xf32>
    %275 = vector.extract_strided_slice %272 {offsets = [0, 0, 0], sizes = [1, 1, 256], strides = [1, 1, 1]} : vector<1x4x256xf32> to vector<1x1x256xf32>
    %276 = vector.shape_cast %274 : vector<8x1xf32> to vector<1x8x1xf32>
    %277 = vector.broadcast %276 : vector<1x8x1xf32> to vector<1x8x256xf32>
    %278 = vector.broadcast %275 : vector<1x1x256xf32> to vector<1x8x256xf32>
    %279 = arith.mulf %277, %278 : vector<1x8x256xf32>
    %280 = arith.addf %273, %279 : vector<1x8x256xf32>
    %281 = vector.extract_strided_slice %17 {offsets = [0, 1], sizes = [8, 1], strides = [1, 1]} : vector<8x4xf32> to vector<8x1xf32>
    %282 = vector.extract_strided_slice %272 {offsets = [0, 1, 0], sizes = [1, 1, 256], strides = [1, 1, 1]} : vector<1x4x256xf32> to vector<1x1x256xf32>
    %283 = vector.shape_cast %281 : vector<8x1xf32> to vector<1x8x1xf32>
    %284 = vector.broadcast %283 : vector<1x8x1xf32> to vector<1x8x256xf32>
    %285 = vector.broadcast %282 : vector<1x1x256xf32> to vector<1x8x256xf32>
    %286 = arith.mulf %284, %285 : vector<1x8x256xf32>
    %287 = arith.addf %280, %286 : vector<1x8x256xf32>
    %288 = vector.extract_strided_slice %17 {offsets = [0, 2], sizes = [8, 1], strides = [1, 1]} : vector<8x4xf32> to vector<8x1xf32>
    %289 = vector.extract_strided_slice %272 {offsets = [0, 2, 0], sizes = [1, 1, 256], strides = [1, 1, 1]} : vector<1x4x256xf32> to vector<1x1x256xf32>
    %290 = vector.shape_cast %288 : vector<8x1xf32> to vector<1x8x1xf32>
    %291 = vector.broadcast %290 : vector<1x8x1xf32> to vector<1x8x256xf32>
    %292 = vector.broadcast %289 : vector<1x1x256xf32> to vector<1x8x256xf32>
    %293 = arith.mulf %291, %292 : vector<1x8x256xf32>
    %294 = arith.addf %287, %293 : vector<1x8x256xf32>
    %295 = vector.extract_strided_slice %17 {offsets = [0, 3], sizes = [8, 1], strides = [1, 1]} : vector<8x4xf32> to vector<8x1xf32>
    %296 = vector.extract_strided_slice %272 {offsets = [0, 3, 0], sizes = [1, 1, 256], strides = [1, 1, 1]} : vector<1x4x256xf32> to vector<1x1x256xf32>
    %297 = vector.shape_cast %295 : vector<8x1xf32> to vector<1x8x1xf32>
    %298 = vector.broadcast %297 : vector<1x8x1xf32> to vector<1x8x256xf32>
    %299 = vector.broadcast %296 : vector<1x1x256xf32> to vector<1x8x256xf32>
    %300 = arith.mulf %298, %299 : vector<1x8x256xf32>
    %301 = arith.addf %294, %300 : vector<1x8x256xf32>
    %302 = vector.shape_cast %11 : vector<8x1xf32> to vector<1x8x1xf32>
    %303 = vector.broadcast %302 : vector<1x8x1xf32> to vector<1x8x256xf32>
    %304 = arith.addf %301, %303 : vector<1x8x256xf32>
    %305 = vector.extract_strided_slice %304 {offsets = [0, 0, 0], sizes = [1, 4, 256], strides = [1, 1, 1]} : vector<1x8x256xf32> to vector<1x4x256xf32>
    %306 = vector.extract_strided_slice %304 {offsets = [0, 4, 0], sizes = [1, 4, 256], strides = [1, 1, 1]} : vector<1x8x256xf32> to vector<1x4x256xf32>
    %307 = arith.mulf %305, %306 : vector<1x4x256xf32>
    %cst_45 = arith.constant 0.000000e+00 : f32
    %308 = vector.broadcast %cst_45 : f32 to vector<1x4x256xf32>
    %309 = vector.extract_strided_slice %18 {offsets = [0, 0], sizes = [4, 1], strides = [1, 1]} : vector<4x4xf32> to vector<4x1xf32>
    %310 = vector.extract_strided_slice %307 {offsets = [0, 0, 0], sizes = [1, 1, 256], strides = [1, 1, 1]} : vector<1x4x256xf32> to vector<1x1x256xf32>
    %311 = vector.shape_cast %309 : vector<4x1xf32> to vector<1x4x1xf32>
    %312 = vector.broadcast %311 : vector<1x4x1xf32> to vector<1x4x256xf32>
    %313 = vector.broadcast %310 : vector<1x1x256xf32> to vector<1x4x256xf32>
    %314 = arith.mulf %312, %313 : vector<1x4x256xf32>
    %315 = arith.addf %308, %314 : vector<1x4x256xf32>
    %316 = vector.extract_strided_slice %18 {offsets = [0, 1], sizes = [4, 1], strides = [1, 1]} : vector<4x4xf32> to vector<4x1xf32>
    %317 = vector.extract_strided_slice %307 {offsets = [0, 1, 0], sizes = [1, 1, 256], strides = [1, 1, 1]} : vector<1x4x256xf32> to vector<1x1x256xf32>
    %318 = vector.shape_cast %316 : vector<4x1xf32> to vector<1x4x1xf32>
    %319 = vector.broadcast %318 : vector<1x4x1xf32> to vector<1x4x256xf32>
    %320 = vector.broadcast %317 : vector<1x1x256xf32> to vector<1x4x256xf32>
    %321 = arith.mulf %319, %320 : vector<1x4x256xf32>
    %322 = arith.addf %315, %321 : vector<1x4x256xf32>
    %323 = vector.extract_strided_slice %18 {offsets = [0, 2], sizes = [4, 1], strides = [1, 1]} : vector<4x4xf32> to vector<4x1xf32>
    %324 = vector.extract_strided_slice %307 {offsets = [0, 2, 0], sizes = [1, 1, 256], strides = [1, 1, 1]} : vector<1x4x256xf32> to vector<1x1x256xf32>
    %325 = vector.shape_cast %323 : vector<4x1xf32> to vector<1x4x1xf32>
    %326 = vector.broadcast %325 : vector<1x4x1xf32> to vector<1x4x256xf32>
    %327 = vector.broadcast %324 : vector<1x1x256xf32> to vector<1x4x256xf32>
    %328 = arith.mulf %326, %327 : vector<1x4x256xf32>
    %329 = arith.addf %322, %328 : vector<1x4x256xf32>
    %330 = vector.extract_strided_slice %18 {offsets = [0, 3], sizes = [4, 1], strides = [1, 1]} : vector<4x4xf32> to vector<4x1xf32>
    %331 = vector.extract_strided_slice %307 {offsets = [0, 3, 0], sizes = [1, 1, 256], strides = [1, 1, 1]} : vector<1x4x256xf32> to vector<1x1x256xf32>
    %332 = vector.shape_cast %330 : vector<4x1xf32> to vector<1x4x1xf32>
    %333 = vector.broadcast %332 : vector<1x4x1xf32> to vector<1x4x256xf32>
    %334 = vector.broadcast %331 : vector<1x1x256xf32> to vector<1x4x256xf32>
    %335 = arith.mulf %333, %334 : vector<1x4x256xf32>
    %336 = arith.addf %329, %335 : vector<1x4x256xf32>
    %337 = vector.shape_cast %12 : vector<4x1xf32> to vector<1x4x1xf32>
    %338 = vector.broadcast %337 : vector<1x4x1xf32> to vector<1x4x256xf32>
    %339 = arith.addf %336, %338 : vector<1x4x256xf32>
    %340 = vector.shape_cast %8 : vector<4x1xf32> to vector<1x4x1xf32>
    %341 = vector.broadcast %340 : vector<1x4x1xf32> to vector<1x4x256xf32>
    %342 = arith.mulf %339, %341 : vector<1x4x256xf32>
    %343 = arith.addf %250, %342 : vector<1x4x256xf32>
    %c0_46 = arith.constant 0 : index
    %c0_47 = arith.constant 0 : index
    %c0_48 = arith.constant 0 : index
    %344 = vector.load %arg5[%c0_46, %c0_47, %c0_48] : memref<1x4x256xf32, #tpu.memory_space<vmem>>, vector<1x4x256xf32>
    tpu.vector_store %arg5[%c0_46, %c0_47, %c0_48], %343 {strides = array<i32>} : memref<1x4x256xf32, #tpu.memory_space<vmem>>, vector<1x4x256xf32>,
    return
  }
  func.func @transform_0(%arg0: i32) -> (i32, i32, i32) {
    %c0_i32 = arith.constant 0 : i32
    %c0_i32_0 = arith.constant 0 : i32
    %c0_i32_1 = arith.constant 0 : i32
    return %arg0, %c0_i32, %c0_i32_0 : i32, i32, i32
  }
  func.func @transform_1(%arg0: i32) -> (i32, i32) {
    %c0_i32 = arith.constant 0 : i32
    %c0_i32_0 = arith.constant 0 : i32
    %c0_i32_1 = arith.constant 0 : i32
    return %c0_i32, %c0_i32_0 : i32, i32
  }
  func.func @transform_2(%arg0: i32) -> (i32, i32) {
    %c0_i32 = arith.constant 0 : i32
    %c0_i32_0 = arith.constant 0 : i32
    %c0_i32_1 = arith.constant 0 : i32
    return %c0_i32, %c0_i32_0 : i32, i32
  }
  func.func @transform_3(%arg0: i32) -> (i32, i32) {
    %c0_i32 = arith.constant 0 : i32
    %c0_i32_0 = arith.constant 0 : i32
    %c0_i32_1 = arith.constant 0 : i32
    return %c0_i32, %c0_i32_0 : i32, i32
  }
  func.func @transform_4(%arg0: i32) -> (i32, i32, i32) {
    %c0_i32 = arith.constant 0 : i32
    %c0_i32_0 = arith.constant 0 : i32
    %c0_i32_1 = arith.constant 0 : i32
    return %arg0, %c0_i32, %c0_i32_0 : i32, i32, i32
  }
}

</mosaic_0001>

<llo_original>
// kernel: tpu_custom_call.1
$region0: #{tpu_custom_call.1}
  #allocation0 [shape = 'u32[]', space=smem, size = 0x4, offset = 0x4, fixed_abs, tag = 'smem constant byte address 0x4 - core index']
  #allocation1 [shape = 'u32[144,128]{1,0:T(1,128)}', space=vmem, size = 0x12000, scoped, tag = 'internal scratch']
  %s0 = inlined_call_operand.vmem [shape: f32[2,4,256], index: 0, kind: input, shape index: {}]
  %s1 = inlined_call_operand.vmem [shape: f32[96,1], index: 1, kind: input, shape index: {}]
  %s2 = inlined_call_operand.vmem [shape: f32[48,16], index: 2, kind: input, shape index: {}]
  %s3 = inlined_call_operand.vmem [shape: f32[8,256], index: 3, kind: input, shape index: {}]
  %s4 = inlined_call_operand.hbm [shape: f32[2,4,256], index: 4, kind: output, shape index: {}]
  %s5 = sld [smem:[#allocation0]]
  $region49: #{tpu_custom_call.1} parent=0
    _
  %s7 = ssub.s32 1, %s5
  %s8 = scalar_select 0, %s7, %s5
  $region1: #{tpu_custom_call.1} parent=0
    #allocation2 [shape = 'u8[8192]{0}', space=vmem, size = 0x2000, scoped, tag = 'output window, operand 0']
    #allocation3 [shape = 's32[2]{0}', space=sflag, size = 0x8, scoped, tag = 'scoped memory for tpu_custom_call.1']
    %9 = vsyncpa [#allocation3], 0
    %s10 = scalar_lea.sflag [#allocation3], 1
    %11 = vsyncpa %s10, 0
    loop: start=0, step=1, limit=4
    $region2: #{tpu_custom_call.1} parent=1 // loop_pre_header
      _
    $region3: #{tpu_custom_call.1} parent=1 // loop_header
      %s13 = sphi 0, %s17
      %p14 = scmp.ge.s32.totalorder %s13, 4
      %s23 = sphi 0, %s25
      %s26 = sphi 0, %s23
      %s27 = sphi 0, %s26
      %s43 = sphi 0, %s27
      %s47 = sphi 0, %s47
      %s49 = sphi 0, %s47
      %s50 = sphi 0, %s49
      %s64 = sphi 0, %s50
      %s68 = sphi 0, %s68
      %s70 = sphi 0, %s68
      %s71 = sphi 0, %s70
      %s85 = sphi 0, %s71
      %s89 = sphi 0, %s89
      %s91 = sphi 0, %s89
      %s92 = sphi 0, %s91
      %s106 = sphi 0, %s92
      %s112 = sphi 0, %s114
      %s115 = sphi 0, %s112
      %s116 = sphi 0, %s115
      %s132 = sphi 0, %s116
    $region4: #{tpu_custom_call.1} parent=1 // loop_header_branch
      %16 = sbr.rel (%p14) target = $region8
    $region5: #{tpu_custom_call.1} parent=1 // loop_body
      %s18 = ssub.s32 %s13, 1
      %s19 = ssub.s32 %s13, 2
      %s20 = sadd.s32 %s13, 1
      %s21 = ssub.s32 %s13, %s20
      %p22 = scmp.eq.s32.totalorder %s21, 0
      %s24 = sadd.s32 %s23, 1
      %s25 = scalar_select %p22, %s23, %s24
      %p28 = pneg %p22
      %p29 = scmp.eq.s32.totalorder %s13, 1
      %p30 = por %p28, %p29
      %p31 = scmp.ne.s32.totalorder %s23, %s26
      %p32 = scmp.eq.s32.totalorder %s13, 0
      %p33 = por %p31, %p32
      %p34 = scmp.ne.s32.totalorder %s23, %s26
      %p35 = scmp.eq.s32.totalorder %s18, 1
      %p36 = por %p34, %p35
      %p37 = scmp.ne.s32.totalorder %s26, %s27
      %p38 = scmp.eq.s32.totalorder %s18, 0
      %p39 = por %p37, %p38
      %p40 = scmp.ne.s32.totalorder %s26, %s27
      %p41 = scmp.eq.s32.totalorder %s19, 1
      %p42 = por %p40, %p41
      %p44 = scmp.ne.s32.totalorder %s27, %s43
      %p45 = scmp.eq.s32.totalorder %s19, 0
      %p46 = por %p44, %p45
      %s48 = sadd.s32 %s47, 1
      %p51 = scmp.eq.s32.totalorder %s13, 1
      %p52 = scmp.ne.s32.totalorder %s47, %s49
      %p53 = scmp.eq.s32.totalorder %s13, 0
      %p54 = por %p52, %p53
      %p55 = scmp.ne.s32.totalorder %s47, %s49
      %p56 = scmp.eq.s32.totalorder %s18, 1
      %p57 = por %p55, %p56
      %p58 = scmp.ne.s32.totalorder %s49, %s50
      %p59 = scmp.eq.s32.totalorder %s18, 0
      %p60 = por %p58, %p59
      %p61 = scmp.ne.s32.totalorder %s49, %s50
      %p62 = scmp.eq.s32.totalorder %s19, 1
      %p63 = por %p61, %p62
      %p65 = scmp.ne.s32.totalorder %s50, %s64
      %p66 = scmp.eq.s32.totalorder %s19, 0
      %p67 = por %p65, %p66
      %s69 = sadd.s32 %s68, 1
      %p72 = scmp.eq.s32.totalorder %s13, 1
      %p73 = scmp.ne.s32.totalorder %s68, %s70
      %p74 = scmp.eq.s32.totalorder %s13, 0
      %p75 = por %p73, %p74
      %p76 = scmp.ne.s32.totalorder %s68, %s70
      %p77 = scmp.eq.s32.totalorder %s18, 1
      %p78 = por %p76, %p77
      %p79 = scmp.ne.s32.totalorder %s70, %s71
      %p80 = scmp.eq.s32.totalorder %s18, 0
      %p81 = por %p79, %p80
      %p82 = scmp.ne.s32.totalorder %s70, %s71
      %p83 = scmp.eq.s32.totalorder %s19, 1
      %p84 = por %p82, %p83
      %p86 = scmp.ne.s32.totalorder %s71, %s85
      %p87 = scmp.eq.s32.totalorder %s19, 0
      %p88 = por %p86, %p87
      %s90 = sadd.s32 %s89, 1
      %p93 = scmp.eq.s32.totalorder %s13, 1
      %p94 = scmp.ne.s32.totalorder %s89, %s91
      %p95 = scmp.eq.s32.totalorder %s13, 0
      %p96 = por %p94, %p95
      %p97 = scmp.ne.s32.totalorder %s89, %s91
      %p98 = scmp.eq.s32.totalorder %s18, 1
      %p99 = por %p97, %p98
      %p100 = scmp.ne.s32.totalorder %s91, %s92
      %p101 = scmp.eq.s32.totalorder %s18, 0
      %p102 = por %p100, %p101
      %p103 = scmp.ne.s32.totalorder %s91, %s92
      %p104 = scmp.eq.s32.totalorder %s19, 1
      %p105 = por %p103, %p104
      %p107 = scmp.ne.s32.totalorder %s92, %s106
      %p108 = scmp.eq.s32.totalorder %s19, 0
      %p109 = por %p107, %p108
      %s110 = ssub.s32 %s13, %s20
      %p111 = scmp.eq.s32.totalorder %s110, 0
      %s113 = sadd.s32 %s112, 1
      %s114 = scalar_select %p111, %s112, %s113
      %p117 = pneg %p111
      %p118 = scmp.eq.s32.totalorder %s13, 1
      %p119 = por %p117, %p118
      %p120 = scmp.ne.s32.totalorder %s112, %s115
      %p121 = scmp.eq.s32.totalorder %s13, 0
      %p122 = por %p120, %p121
      %p123 = scmp.ne.s32.totalorder %s112, %s115
      %p124 = scmp.eq.s32.totalorder %s18, 1
      %p125 = por %p123, %p124
      %p126 = scmp.ne.s32.totalorder %s115, %s116
      %p127 = scmp.eq.s32.totalorder %s18, 0
      %p128 = por %p126, %p127
      %p129 = scmp.ne.s32.totalorder %s115, %s116
      %p130 = scmp.eq.s32.totalorder %s19, 1
      %p131 = por %p129, %p130
      %p133 = scmp.ne.s32.totalorder %s116, %s132
      %p134 = scmp.eq.s32.totalorder %s19, 0
      %p135 = por %p133, %p134
      %p136 = scmp.le.s32.totalorder 1, %s13
      %p137 = scmp.lt.s32.totalorder %s13, 3
      %p138 = pnand %p136, %p137
      %p139 = pneg %p138
      // Predicated region
      $region9: #{tpu_custom_call.1} parent=5 // pred_check
        _
      $region10: #{tpu_custom_call.1} parent=5 // pred_check_branch
        %141 = sbr.rel (%p138) target = $region12
      $region11: #{tpu_custom_call.1} parent=5 // pred_region
        %s142 = ssub.s32 %s13, 1
        // Predicated region
        $region13: #{tpu_custom_call.1} parent=11 // pred_check
          %p143 = pneg %p60
        $region14: #{tpu_custom_call.1} parent=11 // pred_check_branch
          %145 = sbr.rel (%p143) target = $region16
        $region15: #{tpu_custom_call.1} parent=11 // pred_region
          _
        $region16: #{tpu_custom_call.1} parent=11 // pred_fallthru
          _
        // Predicated region
        $region17: #{tpu_custom_call.1} parent=11 // pred_check
          %p146 = pneg %p81
        $region18: #{tpu_custom_call.1} parent=11 // pred_check_branch
          %148 = sbr.rel (%p146) target = $region20
        $region19: #{tpu_custom_call.1} parent=11 // pred_region
          _
        $region20: #{tpu_custom_call.1} parent=11 // pred_fallthru
          _
        // Predicated region
        $region21: #{tpu_custom_call.1} parent=11 // pred_check
          %p149 = pneg %p102
        $region22: #{tpu_custom_call.1} parent=11 // pred_check_branch
          %151 = sbr.rel (%p149) target = $region24
        $region23: #{tpu_custom_call.1} parent=11 // pred_region
          _
        $region24: #{tpu_custom_call.1} parent=11 // pred_fallthru
          _
      $region12: #{tpu_custom_call.1} parent=5 // pred_fallthru
        _
      %p152 = scmp.lt.s32.totalorder %s13, 2
      // Predicated region
      $region25: #{tpu_custom_call.1} parent=5 // pred_check
        %p153 = pneg %p152
      $region26: #{tpu_custom_call.1} parent=5 // pred_check_branch
        %155 = sbr.rel (%p153) target = $region28
      $region27: #{tpu_custom_call.1} parent=5 // pred_region
        // Predicated region
        $region29: #{tpu_custom_call.1} parent=27 // pred_check
          %p156 = pneg %p33
        $region30: #{tpu_custom_call.1} parent=27 // pred_check_branch
          %158 = sbr.rel (%p156) target = $region32
        $region31: #{tpu_custom_call.1} parent=27 // pred_region
          %p159 = scmp.lt.s32.totalorder %s13, 1
          %s160 = scalar_select %p159, %s13, 1
          %s161 = smul.addr %s160, 2
          %s162 = smul.addr %s161, 4
          %s163 = scalar_lea.vmem %s0, %s162
        $region32: #{tpu_custom_call.1} parent=27 // pred_fallthru
          _
      $region28: #{tpu_custom_call.1} parent=5 // pred_fallthru
        _
      %p164 = scmp.le.s32.totalorder 1, %s13
      %p165 = scmp.lt.s32.totalorder %s13, 3
      %p166 = pnand %p164, %p165
      %p167 = pneg %p166
      // Predicated region
      $region33: #{tpu_custom_call.1} parent=5 // pred_check
        _
      $region34: #{tpu_custom_call.1} parent=5 // pred_check_branch
        %169 = sbr.rel (%p166) target = $region36
      $region35: #{tpu_custom_call.1} parent=5 // pred_region
        %s170 = ssub.s32 %s13, 1
        %p171 = scmp.lt.s32.totalorder %s18, 1
        %s172 = scalar_select %p171, %s18, 1
        %s173 = smul.addr %s172, 2
        %s174 = smul.addr %s173, 4
        %s175 = scalar_lea.vmem %s0, %s174
        %p176 = pneg %p39
        %p177 = pneg %p36
        %p178 = pneg %p60
        %p179 = pneg %p57
        %p180 = pneg %p81
        %p181 = pneg %p78
        %p182 = pneg %p102
        %p183 = pneg %p99
        %p184 = pneg %p128
        %p185 = pneg %p125
        %s186 = sand.u32 %s115, 1
        %s187 = scalar_lea.sflag [#allocation3], %s186
        %s188 = sand.u32 %s115, 1
        %s189 = smul.addr %s188, 8
        %s190 = scalar_lea.vmem [#allocation2], %s189
        %p191 = scmp.lt.s32.totalorder %s18, 1
        %s192 = scalar_select %p191, %s18, 1
        %s193 = smul.addr %s192, 2
        %s194 = smul.addr %s193, 4
        %s195 = scalar_lea.vmem %s0, %s194
        %v196 = vld [vmem:[%s195] sm:$0xff]
        %v197 = vld [vmem:[%s1] sm:$0xf]
        %v198 = vld [vmem:[%s1 + $0x8] sm:$0xf]
        %v199 = vld [vmem:[%s1 + $0x10] sm:$0xff]
        %v200 = vld [vmem:[%s1 + $0x18] sm:$0xff]
        %v201 = vld [vmem:[%s1 + $0x20] sm:$0xf]
        %v202 = vld [vmem:[%s1 + $0x28] sm:$0xf]
        %v203 = vld [vmem:[%s1 + $0x30] sm:$0xf]
        %v204 = vld [vmem:[%s1 + $0x38] sm:$0xf]
        %v205 = vld [vmem:[%s1 + $0x40] sm:$0xf]
        %v206 = vld [vmem:[%s1 + $0x48] sm:$0xf]
        %v207 = vld [vmem:[%s1 + $0x50] sm:$0xff]
        %v208 = vld [vmem:[%s1 + $0x58] sm:$0xf]
        %v209 = vld [vmem:[%s2] sm:$0xff]
        %v210 = vld [vmem:[%s2 + $0x8] sm:$0xff]
        %v211 = vld [vmem:[%s2 + $0x10] sm:$0xf]
        %v212 = vld [vmem:[%s2 + $0x18] sm:$0xf]
        %v213 = vld [vmem:[%s2 + $0x20] sm:$0xff]
        %v214 = vld [vmem:[%s2 + $0x28] sm:$0xf]
        %v215 = vld [vmem:[%s3] sm:$0xff]
        %v216 = vld [vmem:[%s3 + $0x8] sm:$0xff]
        %v218 = vcombine.high %v196, %v196
        %vm220 = vcmask 1043456
        %v221 = vsel %vm220, %v196, 0.0
        %v222 = vrot.slane %v221, 4
        %v223 = vadd.f32 %v221, %v222
        %v224 = vrot.slane %v223, 2
        %v225 = vadd.f32 %v223, %v224
        %v226 = vrot.slane %v225, 1
        %v227 = vadd.f32 %v225, %v226
        %v228 = vsel %vm220, %v218, 0.0
        %v229 = vrot.slane %v228, 4
        %v230 = vadd.f32 %v228, %v229
        %v231 = vrot.slane %v230, 2
        %v232 = vadd.f32 %v230, %v231
        %v233 = vrot.slane %v232, 1
        %v234 = vadd.f32 %v232, %v233
        %v235 = vrcp.pop 4.0
        %v236 = vmul.f32 %v227, %v235
        %v237 = vmul.f32 %v234, %v235
        %v240 = vcombine.low %v236, %v237
        %v242 = vsub.f32 %v196, %v240
        %v243 = vmul.f32 %v242, %v242
        %v245 = vcombine.high %v243, %v243
        %v247 = vsel %vm220, %v243, 0.0
        %v248 = vrot.slane %v247, 4
        %v249 = vadd.f32 %v247, %v248
        %v250 = vrot.slane %v249, 2
        %v251 = vadd.f32 %v249, %v250
        %v252 = vrot.slane %v251, 1
        %v253 = vadd.f32 %v251, %v252
        %v254 = vsel %vm220, %v245, 0.0
        %v255 = vrot.slane %v254, 4
        %v256 = vadd.f32 %v254, %v255
        %v257 = vrot.slane %v256, 2
        %v258 = vadd.f32 %v256, %v257
        %v259 = vrot.slane %v258, 1
        %v260 = vadd.f32 %v258, %v259
        %v261 = vmul.f32 %v253, %v235
        %v262 = vmul.f32 %v260, %v235
        %v263 = vadd.f32 %v261, 1e-06
        %v264 = vadd.f32 %v262, 1e-06
        %v265 = vrsqrt.pop %v263
        %v266 = vrsqrt.pop %v264
        %v269 = vcombine.low %v265, %v266
        %v271 = vmul.f32 %v242, %v269
        %273 = vset.pattern.permute.xlu0 0
        %274 = vperm.xlu0 %273, %v197
        %v275 = vpop.permute.xlu0 %274
        %v277 = vunpack.c.l.s4 839922192
        %v278 = vunpack.c.0.s8 %v277
        %v279 = vlaneseq
        %v280 = vshrl.u32 %v279, 7
        %v281 = vsub.s32 %v278, %v280
        %v282 = vrot.slane %v275, %v281
        %v284 = vmul.f32 %v271, %v282
        %286 = vset.pattern.permute.xlu0 0
        %287 = vperm.xlu0 %286, %v198
        %v288 = vpop.permute.xlu0 %287
        %v290 = vunpack.c.l.s4 839922192
        %v291 = vunpack.c.0.s8 %v290
        %v292 = vlaneseq
        %v293 = vshrl.u32 %v292, 7
        %v294 = vsub.s32 %v291, %v293
        %v295 = vrot.slane %v288, %v294
        %v297 = vadd.f32 %v284, %v295
        %299 = vset.pattern.permute.xlu0 0
        %300 = vperm.xlu0 %299, %v209
        %v301 = vpop.permute.xlu0 %300
        %v304 = vlaneseq
        %v305 = vshrl.u32 %v304, 7
        %v306 = vsub.s32 0, %v305
        %v307 = vrot.slane %v297, %v306
        %v308 = vlaneseq
        %v309 = vshrl.u32 %v308, 7
        %v310 = vsub.s32 4, %v309
        %v311 = vrot.slane %v297, %v310
        %v314 = vlaneseq
        %v315 = vshrl.u32 %v314, 7
        %v316 = vsub.s32 0, %v315
        %v317 = vrot.slane %v307, %v316
        %v318 = vlaneseq
        %v319 = vshrl.u32 %v318, 7
        %v320 = vsub.s32 0, %v319
        %v321 = vrot.slane %v311, %v320
        %v322 = vmul.f32 %v301, %v317
        %v323 = vmul.f32 %v301, %v321
        %v324 = vadd.f32 %v322, 0.0
        %v325 = vadd.f32 %v323, 0.0
        %326 = vset.pattern.permute.xlu0 1
        %327 = vperm.xlu0 %326, %v209
        %v328 = vpop.permute.xlu0 %327
        %v330 = vlaneseq
        %v331 = vshrl.u32 %v330, 7
        %v332 = vsub.s32 1, %v331
        %v333 = vrot.slane %v297, %v332
        %v334 = vlaneseq
        %v335 = vshrl.u32 %v334, 7
        %v336 = vsub.s32 5, %v335
        %v337 = vrot.slane %v297, %v336
        %v340 = vlaneseq
        %v341 = vshrl.u32 %v340, 7
        %v342 = vsub.s32 1, %v341
        %v343 = vrot.slane %v333, %v342
        %v344 = vlaneseq
        %v345 = vshrl.u32 %v344, 7
        %v346 = vsub.s32 1, %v345
        %v347 = vrot.slane %v337, %v346
        %v348 = vmul.f32 %v328, %v343
        %v349 = vmul.f32 %v328, %v347
        %v350 = vadd.f32 %v324, %v348
        %v351 = vadd.f32 %v325, %v349
        %352 = vset.pattern.permute.xlu0 2
        %353 = vperm.xlu0 %352, %v209
        %v354 = vpop.permute.xlu0 %353
        %v356 = vlaneseq
        %v357 = vshrl.u32 %v356, 7
        %v358 = vsub.s32 2, %v357
        %v359 = vrot.slane %v297, %v358
        %v360 = vlaneseq
        %v361 = vshrl.u32 %v360, 7
        %v362 = vsub.s32 6, %v361
        %v363 = vrot.slane %v297, %v362
        %v366 = vlaneseq
        %v367 = vshrl.u32 %v366, 7
        %v368 = vsub.s32 2, %v367
        %v369 = vrot.slane %v359, %v368
        %v370 = vlaneseq
        %v371 = vshrl.u32 %v370, 7
        %v372 = vsub.s32 2, %v371
        %v373 = vrot.slane %v363, %v372
        %v374 = vmul.f32 %v354, %v369
        %v375 = vmul.f32 %v354, %v373
        %v376 = vadd.f32 %v350, %v374
        %v377 = vadd.f32 %v351, %v375
        %378 = vset.pattern.permute.xlu0 3
        %379 = vperm.xlu0 %378, %v209
        %v380 = vpop.permute.xlu0 %379
        %v382 = vlaneseq
        %v383 = vshrl.u32 %v382, 7
        %v384 = vsub.s32 3, %v383
        %v385 = vrot.slane %v297, %v384
        %v386 = vlaneseq
        %v387 = vshrl.u32 %v386, 7
        %v388 = vsub.s32 7, %v387
        %v389 = vrot.slane %v297, %v388
        %v392 = vlaneseq
        %v393 = vshrl.u32 %v392, 7
        %v394 = vsub.s32 3, %v393
        %v395 = vrot.slane %v385, %v394
        %v396 = vlaneseq
        %v397 = vshrl.u32 %v396, 7
        %v398 = vsub.s32 3, %v397
        %v399 = vrot.slane %v389, %v398
        %v400 = vmul.f32 %v380, %v395
        %v401 = vmul.f32 %v380, %v399
        %v402 = vadd.f32 %v376, %v400
        %v403 = vadd.f32 %v377, %v401
        %405 = vset.pattern.permute.xlu0 0
        %406 = vperm.xlu0 %405, %v199
        %v407 = vpop.permute.xlu0 %406
        %v409 = vadd.f32 %v402, %v407
        %v410 = vadd.f32 %v403, %v407
        %411 = vrot.lane.b32.xlu0 %v409, 17
        %v412 = vpop.permute.xlu0 %411
        %413 = vrot.lane.b32.xlu0 %v410, 17
        %v414 = vpop.permute.xlu0 %413
        %v415 = vlaneseq
        %v416 = vand.u32 %v415, 127
        %vm417 = vcmp.lt.s32.totalorder %v416, 17
        %v418 = vsel %vm417, %v412, %v414
        %v419 = vsel %vm417, %v414, %v412
        %v420 = vlaneseq
        %v421 = vshrl.u32 %v420, 7
        %v422 = vsub.s32 0, %v421
        %v423 = vrot.slane %v215, %v422
        %v424 = vlaneseq
        %v425 = vshrl.u32 %v424, 7
        %v426 = vsub.s32 0, %v425
        %v427 = vrot.slane %v216, %v426
        %v428 = vmul.f32 %v419, %v423
        %v429 = vmul.f32 %v418, %v427
        %431 = vset.pattern.permute.xlu0 0
        %432 = vperm.xlu0 %431, %v210
        %v433 = vpop.permute.xlu0 %432
        %v435 = vmul.f32 %v433, %v428
        %v436 = vmul.f32 %v433, %v429
        %v437 = vadd.f32 %v435, 0.0
        %v438 = vadd.f32 %v436, 0.0
        %439 = vrot.lane.b32.xlu0 %v409, 16
        %v440 = vpop.permute.xlu0 %439
        %441 = vrot.lane.b32.xlu0 %v410, 16
        %v442 = vpop.permute.xlu0 %441
        %vm443 = vcmp.lt.s32.totalorder %v416, 16
        %v444 = vsel %vm443, %v440, %v442
        %v445 = vsel %vm443, %v442, %v440
        %v446 = vlaneseq
        %v447 = vshrl.u32 %v446, 7
        %v448 = vsub.s32 1, %v447
        %v449 = vrot.slane %v215, %v448
        %v450 = vlaneseq
        %v451 = vshrl.u32 %v450, 7
        %v452 = vsub.s32 1, %v451
        %v453 = vrot.slane %v216, %v452
        %v454 = vmul.f32 %v445, %v449
        %v455 = vmul.f32 %v444, %v453
        %456 = vset.pattern.permute.xlu0 1
        %457 = vperm.xlu0 %456, %v210
        %v458 = vpop.permute.xlu0 %457
        %v460 = vmul.f32 %v458, %v454
        %v461 = vmul.f32 %v458, %v455
        %v462 = vadd.f32 %v437, %v460
        %v463 = vadd.f32 %v438, %v461
        %464 = vrot.lane.b32.xlu0 %v409, 15
        %v465 = vpop.permute.xlu0 %464
        %466 = vrot.lane.b32.xlu0 %v410, 15
        %v467 = vpop.permute.xlu0 %466
        %vm468 = vcmp.lt.s32.totalorder %v416, 15
        %v469 = vsel %vm468, %v465, %v467
        %v470 = vsel %vm468, %v467, %v465
        %v471 = vlaneseq
        %v472 = vshrl.u32 %v471, 7
        %v473 = vsub.s32 2, %v472
        %v474 = vrot.slane %v215, %v473
        %v475 = vlaneseq
        %v476 = vshrl.u32 %v475, 7
        %v477 = vsub.s32 2, %v476
        %v478 = vrot.slane %v216, %v477
        %v479 = vmul.f32 %v470, %v474
        %v480 = vmul.f32 %v469, %v478
        %481 = vset.pattern.permute.xlu0 2
        %482 = vperm.xlu0 %481, %v210
        %v483 = vpop.permute.xlu0 %482
        %v485 = vmul.f32 %v483, %v479
        %v486 = vmul.f32 %v483, %v480
        %v487 = vadd.f32 %v462, %v485
        %v488 = vadd.f32 %v463, %v486
        %489 = vrot.lane.b32.xlu0 %v409, 1
        %v490 = vpop.permute.xlu0 %489
        %491 = vrot.lane.b32.xlu0 %v410, 1
        %v492 = vpop.permute.xlu0 %491
        %vm493 = vcmp.lt.s32.totalorder %v416, 1
        %v494 = vsel %vm493, %v490, %v492
        %v495 = vsel %vm493, %v492, %v490
        %v496 = vlaneseq
        %v497 = vshrl.u32 %v496, 7
        %v498 = vsub.s32 3, %v497
        %v499 = vrot.slane %v215, %v498
        %v500 = vlaneseq
        %v501 = vshrl.u32 %v500, 7
        %v502 = vsub.s32 3, %v501
        %v503 = vrot.slane %v216, %v502
        %v504 = vmul.f32 %v495, %v499
        %v505 = vmul.f32 %v494, %v503
        %506 = vset.pattern.permute.xlu0 3
        %507 = vperm.xlu0 %506, %v210
        %v508 = vpop.permute.xlu0 %507
        %v510 = vmul.f32 %v508, %v504
        %v511 = vmul.f32 %v508, %v505
        %v512 = vadd.f32 %v487, %v510
        %v513 = vadd.f32 %v488, %v511
        %514 = vset.pattern.permute.xlu0 4
        %515 = vperm.xlu0 %514, %v210
        %v516 = vpop.permute.xlu0 %515
        %v518 = vmul.f32 %v516, %v409
        %v519 = vmul.f32 %v516, %v410
        %v520 = vadd.f32 %v512, %v518
        %v521 = vadd.f32 %v513, %v519
        %522 = vrot.lane.b32.xlu0 %v409, 127
        %v523 = vpop.permute.xlu0 %522
        %524 = vrot.lane.b32.xlu0 %v410, 127
        %v525 = vpop.permute.xlu0 %524
        %vm526 = vcmp.lt.s32.totalorder %v416, 127
        %v527 = vsel %vm526, %v523, %v525
        %v528 = vsel %vm526, %v525, %v523
        %v529 = vlaneseq
        %v530 = vshrl.u32 %v529, 7
        %v531 = vsub.s32 4, %v530
        %v532 = vrot.slane %v215, %v531
        %v533 = vlaneseq
        %v534 = vshrl.u32 %v533, 7
        %v535 = vsub.s32 4, %v534
        %v536 = vrot.slane %v216, %v535
        %v537 = vmul.f32 %v527, %v532
        %v538 = vmul.f32 %v528, %v536
        %539 = vset.pattern.permute.xlu0 5
        %540 = vperm.xlu0 %539, %v210
        %v541 = vpop.permute.xlu0 %540
        %v543 = vmul.f32 %v541, %v537
        %v544 = vmul.f32 %v541, %v538
        %v545 = vadd.f32 %v520, %v543
        %v546 = vadd.f32 %v521, %v544
        %547 = vrot.lane.b32.xlu0 %v409, 113
        %v548 = vpop.permute.xlu0 %547
        %549 = vrot.lane.b32.xlu0 %v410, 113
        %v550 = vpop.permute.xlu0 %549
        %vm551 = vcmp.lt.s32.totalorder %v416, 113
        %v552 = vsel %vm551, %v548, %v550
        %v553 = vsel %vm551, %v550, %v548
        %v554 = vlaneseq
        %v555 = vshrl.u32 %v554, 7
        %v556 = vsub.s32 5, %v555
        %v557 = vrot.slane %v215, %v556
        %v558 = vlaneseq
        %v559 = vshrl.u32 %v558, 7
        %v560 = vsub.s32 5, %v559
        %v561 = vrot.slane %v216, %v560
        %v562 = vmul.f32 %v552, %v557
        %v563 = vmul.f32 %v553, %v561
        %564 = vset.pattern.permute.xlu0 6
        %565 = vperm.xlu0 %564, %v210
        %v566 = vpop.permute.xlu0 %565
        %v568 = vmul.f32 %v566, %v562
        %v569 = vmul.f32 %v566, %v563
        %v570 = vadd.f32 %v545, %v568
        %v571 = vadd.f32 %v546, %v569
        %572 = vrot.lane.b32.xlu0 %v409, 112
        %v573 = vpop.permute.xlu0 %572
        %574 = vrot.lane.b32.xlu0 %v410, 112
        %v575 = vpop.permute.xlu0 %574
        %vm576 = vcmp.lt.s32.totalorder %v416, 112
        %v577 = vsel %vm576, %v573, %v575
        %v578 = vsel %vm576, %v575, %v573
        %v579 = vlaneseq
        %v580 = vshrl.u32 %v579, 7
        %v581 = vsub.s32 6, %v580
        %v582 = vrot.slane %v215, %v581
        %v583 = vlaneseq
        %v584 = vshrl.u32 %v583, 7
        %v585 = vsub.s32 6, %v584
        %v586 = vrot.slane %v216, %v585
        %v587 = vmul.f32 %v577, %v582
        %v588 = vmul.f32 %v578, %v586
        %589 = vset.pattern.permute.xlu0 7
        %590 = vperm.xlu0 %589, %v210
        %v591 = vpop.permute.xlu0 %590
        %v593 = vmul.f32 %v591, %v587
        %v594 = vmul.f32 %v591, %v588
        %v595 = vadd.f32 %v570, %v593
        %v596 = vadd.f32 %v571, %v594
        %597 = vrot.lane.b32.xlu0 %v409, 111
        %v598 = vpop.permute.xlu0 %597
        %599 = vrot.lane.b32.xlu0 %v410, 111
        %v600 = vpop.permute.xlu0 %599
        %vm601 = vcmp.lt.s32.totalorder %v416, 111
        %v602 = vsel %vm601, %v598, %v600
        %v603 = vsel %vm601, %v600, %v598
        %v604 = vlaneseq
        %v605 = vshrl.u32 %v604, 7
        %v606 = vsub.s32 7, %v605
        %v607 = vrot.slane %v215, %v606
        %v608 = vlaneseq
        %v609 = vshrl.u32 %v608, 7
        %v610 = vsub.s32 7, %v609
        %v611 = vrot.slane %v216, %v610
        %v612 = vmul.f32 %v602, %v607
        %v613 = vmul.f32 %v603, %v611
        %614 = vset.pattern.permute.xlu0 8
        %615 = vperm.xlu0 %614, %v210
        %v616 = vpop.permute.xlu0 %615
        %v618 = vmul.f32 %v616, %v612
        %v619 = vmul.f32 %v616, %v613
        %v620 = vadd.f32 %v595, %v618
        %v621 = vadd.f32 %v596, %v619
        %623 = vset.pattern.permute.xlu0 0
        %624 = vperm.xlu0 %623, %v200
        %v625 = vpop.permute.xlu0 %624
        %v627 = vadd.f32 %v620, %v625
        %v628 = vadd.f32 %v621, %v625
        %v631 = vrot.slane %v627, 4
        %v632 = vrot.slane %v628, 4
        %v635 = vmul.f32 %v627, %v631
        %v636 = vmul.f32 %v628, %v632
        %v637 = vsel %vm220, %v635, 0.0
        %v638 = vsel %vm220, %v636, 0.0
        %v639 = vadd.f32 %v637, %v638
        %640 = vadd.xlane.f32.xlu0 %v639
        %v641 = vpop.xlane.xlu0 %640
        %v642 = vrcp.pop 256.0
        %v643 = vmul.f32 %v641, %v642
        %v644 = vadd.f32 %v201, 0.0
        %v645 = vlaneseq
        %v646 = vshrl.u32 %v645, 7
        %v647 = vsub.s32 0, %v646
        %v648 = vrot.slane %v643, %v647
        %v649 = vmul.f32 %v211, %v648
        %v650 = vadd.f32 %v644, %v649
        %v651 = vlaneseq
        %v652 = vshrl.u32 %v651, 7
        %v653 = vsub.s32 1, %v652
        %v654 = vrot.slane %v643, %v653
        %v655 = vmul.f32 %v211, %v654
        %657 = vrot.lane.b32.xlu0 %v655, 127
        %v658 = vpop.permute.xlu0 %657
        %v660 = vadd.f32 %v650, %v658
        %v661 = vlaneseq
        %v662 = vshrl.u32 %v661, 7
        %v663 = vsub.s32 2, %v662
        %v664 = vrot.slane %v643, %v663
        %v665 = vmul.f32 %v211, %v664
        %667 = vrot.lane.b32.xlu0 %v665, 126
        %v668 = vpop.permute.xlu0 %667
        %v670 = vadd.f32 %v660, %v668
        %v671 = vlaneseq
        %v672 = vshrl.u32 %v671, 7
        %v673 = vsub.s32 3, %v672
        %v674 = vrot.slane %v643, %v673
        %v675 = vmul.f32 %v211, %v674
        %677 = vrot.lane.b32.xlu0 %v675, 125
        %v678 = vpop.permute.xlu0 %677
        %v680 = vadd.f32 %v670, %v678
        %682 = vset.pattern.permute.xlu0 0
        %683 = vperm.xlu0 %682, %v680
        %v684 = vpop.permute.xlu0 %683
        %v686 = vmul.f32 %v635, %v684
        %v687 = vmul.f32 %v636, %v684
        %689 = vset.pattern.permute.xlu0 0
        %690 = vperm.xlu0 %689, %v212
        %v691 = vpop.permute.xlu0 %690
        %v693 = vlaneseq
        %v694 = vshrl.u32 %v693, 7
        %v695 = vsub.s32 0, %v694
        %v696 = vrot.slane %v686, %v695
        %v697 = vlaneseq
        %v698 = vshrl.u32 %v697, 7
        %v699 = vsub.s32 0, %v698
        %v700 = vrot.slane %v687, %v699
        %v701 = vmul.f32 %v691, %v696
        %v702 = vmul.f32 %v691, %v700
        %v703 = vadd.f32 %v701, 0.0
        %v704 = vadd.f32 %v702, 0.0
        %705 = vset.pattern.permute.xlu0 1
        %706 = vperm.xlu0 %705, %v212
        %v707 = vpop.permute.xlu0 %706
        %v709 = vlaneseq
        %v710 = vshrl.u32 %v709, 7
        %v711 = vsub.s32 1, %v710
        %v712 = vrot.slane %v686, %v711
        %v713 = vlaneseq
        %v714 = vshrl.u32 %v713, 7
        %v715 = vsub.s32 1, %v714
        %v716 = vrot.slane %v687, %v715
        %v717 = vmul.f32 %v707, %v712
        %v718 = vmul.f32 %v707, %v716
        %v719 = vadd.f32 %v703, %v717
        %v720 = vadd.f32 %v704, %v718
        %721 = vset.pattern.permute.xlu0 2
        %722 = vperm.xlu0 %721, %v212
        %v723 = vpop.permute.xlu0 %722
        %v725 = vlaneseq
        %v726 = vshrl.u32 %v725, 7
        %v727 = vsub.s32 2, %v726
        %v728 = vrot.slane %v686, %v727
        %v729 = vlaneseq
        %v730 = vshrl.u32 %v729, 7
        %v731 = vsub.s32 2, %v730
        %v732 = vrot.slane %v687, %v731
        %v733 = vmul.f32 %v723, %v728
        %v734 = vmul.f32 %v723, %v732
        %v735 = vadd.f32 %v719, %v733
        %v736 = vadd.f32 %v720, %v734
        %737 = vset.pattern.permute.xlu0 3
        %738 = vperm.xlu0 %737, %v212
        %v739 = vpop.permute.xlu0 %738
        %v741 = vlaneseq
        %v742 = vshrl.u32 %v741, 7
        %v743 = vsub.s32 3, %v742
        %v744 = vrot.slane %v686, %v743
        %v745 = vlaneseq
        %v746 = vshrl.u32 %v745, 7
        %v747 = vsub.s32 3, %v746
        %v748 = vrot.slane %v687, %v747
        %v749 = vmul.f32 %v739, %v744
        %v750 = vmul.f32 %v739, %v748
        %v751 = vadd.f32 %v735, %v749
        %v752 = vadd.f32 %v736, %v750
        %754 = vset.pattern.permute.xlu0 0
        %755 = vperm.xlu0 %754, %v202
        %v756 = vpop.permute.xlu0 %755
        %v758 = vadd.f32 %v751, %v756
        %v759 = vadd.f32 %v752, %v756
        %761 = vset.pattern.permute.xlu0 0
        %762 = vperm.xlu0 %761, %v203
        %v763 = vpop.permute.xlu0 %762
        %v765 = vmul.f32 %v758, %v763
        %v766 = vmul.f32 %v759, %v763
        %v769 = vcombine.low %v765, %v766
        %v771 = vadd.f32 %v196, %v769
        %v773 = vcombine.high %v771, %v771
        %v775 = vsel %vm220, %v771, 0.0
        %v776 = vrot.slane %v775, 4
        %v777 = vadd.f32 %v775, %v776
        %v778 = vrot.slane %v777, 2
        %v779 = vadd.f32 %v777, %v778
        %v780 = vrot.slane %v779, 1
        %v781 = vadd.f32 %v779, %v780
        %v782 = vsel %vm220, %v773, 0.0
        %v783 = vrot.slane %v782, 4
        %v784 = vadd.f32 %v782, %v783
        %v785 = vrot.slane %v784, 2
        %v786 = vadd.f32 %v784, %v785
        %v787 = vrot.slane %v786, 1
        %v788 = vadd.f32 %v786, %v787
        %v789 = vmul.f32 %v781, %v235
        %v790 = vmul.f32 %v788, %v235
        %v793 = vcombine.low %v789, %v790
        %v795 = vsub.f32 %v771, %v793
        %v796 = vmul.f32 %v795, %v795
        %v798 = vcombine.high %v796, %v796
        %v800 = vsel %vm220, %v796, 0.0
        %v801 = vrot.slane %v800, 4
        %v802 = vadd.f32 %v800, %v801
        %v803 = vrot.slane %v802, 2
        %v804 = vadd.f32 %v802, %v803
        %v805 = vrot.slane %v804, 1
        %v806 = vadd.f32 %v804, %v805
        %v807 = vsel %vm220, %v798, 0.0
        %v808 = vrot.slane %v807, 4
        %v809 = vadd.f32 %v807, %v808
        %v810 = vrot.slane %v809, 2
        %v811 = vadd.f32 %v809, %v810
        %v812 = vrot.slane %v811, 1
        %v813 = vadd.f32 %v811, %v812
        %v814 = vmul.f32 %v806, %v235
        %v815 = vmul.f32 %v813, %v235
        %v816 = vadd.f32 %v814, 1e-06
        %v817 = vadd.f32 %v815, 1e-06
        %v818 = vrsqrt.pop %v816
        %v819 = vrsqrt.pop %v817
        %v822 = vcombine.low %v818, %v819
        %v824 = vmul.f32 %v795, %v822
        %826 = vset.pattern.permute.xlu0 0
        %827 = vperm.xlu0 %826, %v205
        %v828 = vpop.permute.xlu0 %827
        %v830 = vunpack.c.l.s4 839922192
        %v831 = vunpack.c.0.s8 %v830
        %v832 = vlaneseq
        %v833 = vshrl.u32 %v832, 7
        %v834 = vsub.s32 %v831, %v833
        %v835 = vrot.slane %v828, %v834
        %v837 = vmul.f32 %v824, %v835
        %839 = vset.pattern.permute.xlu0 0
        %840 = vperm.xlu0 %839, %v206
        %v841 = vpop.permute.xlu0 %840
        %v843 = vunpack.c.l.s4 839922192
        %v844 = vunpack.c.0.s8 %v843
        %v845 = vlaneseq
        %v846 = vshrl.u32 %v845, 7
        %v847 = vsub.s32 %v844, %v846
        %v848 = vrot.slane %v841, %v847
        %v850 = vadd.f32 %v837, %v848
        %852 = vset.pattern.permute.xlu0 0
        %853 = vperm.xlu0 %852, %v213
        %v854 = vpop.permute.xlu0 %853
        %v857 = vlaneseq
        %v858 = vshrl.u32 %v857, 7
        %v859 = vsub.s32 0, %v858
        %v860 = vrot.slane %v850, %v859
        %v861 = vlaneseq
        %v862 = vshrl.u32 %v861, 7
        %v863 = vsub.s32 4, %v862
        %v864 = vrot.slane %v850, %v863
        %v867 = vlaneseq
        %v868 = vshrl.u32 %v867, 7
        %v869 = vsub.s32 0, %v868
        %v870 = vrot.slane %v860, %v869
        %v871 = vlaneseq
        %v872 = vshrl.u32 %v871, 7
        %v873 = vsub.s32 0, %v872
        %v874 = vrot.slane %v864, %v873
        %v875 = vmul.f32 %v854, %v870
        %v876 = vmul.f32 %v854, %v874
        %v877 = vadd.f32 %v875, 0.0
        %v878 = vadd.f32 %v876, 0.0
        %879 = vset.pattern.permute.xlu0 1
        %880 = vperm.xlu0 %879, %v213
        %v881 = vpop.permute.xlu0 %880
        %v883 = vlaneseq
        %v884 = vshrl.u32 %v883, 7
        %v885 = vsub.s32 1, %v884
        %v886 = vrot.slane %v850, %v885
        %v887 = vlaneseq
        %v888 = vshrl.u32 %v887, 7
        %v889 = vsub.s32 5, %v888
        %v890 = vrot.slane %v850, %v889
        %v893 = vlaneseq
        %v894 = vshrl.u32 %v893, 7
        %v895 = vsub.s32 1, %v894
        %v896 = vrot.slane %v886, %v895
        %v897 = vlaneseq
        %v898 = vshrl.u32 %v897, 7
        %v899 = vsub.s32 1, %v898
        %v900 = vrot.slane %v890, %v899
        %v901 = vmul.f32 %v881, %v896
        %v902 = vmul.f32 %v881, %v900
        %v903 = vadd.f32 %v877, %v901
        %v904 = vadd.f32 %v878, %v902
        %905 = vset.pattern.permute.xlu0 2
        %906 = vperm.xlu0 %905, %v213
        %v907 = vpop.permute.xlu0 %906
        %v909 = vlaneseq
        %v910 = vshrl.u32 %v909, 7
        %v911 = vsub.s32 2, %v910
        %v912 = vrot.slane %v850, %v911
        %v913 = vlaneseq
        %v914 = vshrl.u32 %v913, 7
        %v915 = vsub.s32 6, %v914
        %v916 = vrot.slane %v850, %v915
        %v919 = vlaneseq
        %v920 = vshrl.u32 %v919, 7
        %v921 = vsub.s32 2, %v920
        %v922 = vrot.slane %v912, %v921
        %v923 = vlaneseq
        %v924 = vshrl.u32 %v923, 7
        %v925 = vsub.s32 2, %v924
        %v926 = vrot.slane %v916, %v925
        %v927 = vmul.f32 %v907, %v922
        %v928 = vmul.f32 %v907, %v926
        %v929 = vadd.f32 %v903, %v927
        %v930 = vadd.f32 %v904, %v928
        %931 = vset.pattern.permute.xlu0 3
        %932 = vperm.xlu0 %931, %v213
        %v933 = vpop.permute.xlu0 %932
        %v935 = vlaneseq
        %v936 = vshrl.u32 %v935, 7
        %v937 = vsub.s32 3, %v936
        %v938 = vrot.slane %v850, %v937
        %v939 = vlaneseq
        %v940 = vshrl.u32 %v939, 7
        %v941 = vsub.s32 7, %v940
        %v942 = vrot.slane %v850, %v941
        %v945 = vlaneseq
        %v946 = vshrl.u32 %v945, 7
        %v947 = vsub.s32 3, %v946
        %v948 = vrot.slane %v938, %v947
        %v949 = vlaneseq
        %v950 = vshrl.u32 %v949, 7
        %v951 = vsub.s32 3, %v950
        %v952 = vrot.slane %v942, %v951
        %v953 = vmul.f32 %v933, %v948
        %v954 = vmul.f32 %v933, %v952
        %v955 = vadd.f32 %v929, %v953
        %v956 = vadd.f32 %v930, %v954
        %958 = vset.pattern.permute.xlu0 0
        %959 = vperm.xlu0 %958, %v207
        %v960 = vpop.permute.xlu0 %959
        %v962 = vadd.f32 %v955, %v960
        %v963 = vadd.f32 %v956, %v960
        %v966 = vrot.slane %v962, 4
        %v967 = vrot.slane %v963, 4
        %v970 = vmul.f32 %v962, %v966
        %v971 = vmul.f32 %v963, %v967
        %973 = vset.pattern.permute.xlu0 0
        %974 = vperm.xlu0 %973, %v214
        %v975 = vpop.permute.xlu0 %974
        %v977 = vlaneseq
        %v978 = vshrl.u32 %v977, 7
        %v979 = vsub.s32 0, %v978
        %v980 = vrot.slane %v970, %v979
        %v981 = vlaneseq
        %v982 = vshrl.u32 %v981, 7
        %v983 = vsub.s32 0, %v982
        %v984 = vrot.slane %v971, %v983
        %v985 = vmul.f32 %v975, %v980
        %v986 = vmul.f32 %v975, %v984
        %v987 = vadd.f32 %v985, 0.0
        %v988 = vadd.f32 %v986, 0.0
        %989 = vset.pattern.permute.xlu0 1
        %990 = vperm.xlu0 %989, %v214
        %v991 = vpop.permute.xlu0 %990
        %v993 = vlaneseq
        %v994 = vshrl.u32 %v993, 7
        %v995 = vsub.s32 1, %v994
        %v996 = vrot.slane %v970, %v995
        %v997 = vlaneseq
        %v998 = vshrl.u32 %v997, 7
        %v999 = vsub.s32 1, %v998
        %v1000 = vrot.slane %v971, %v999
        %v1001 = vmul.f32 %v991, %v996
        %v1002 = vmul.f32 %v991, %v1000
        %v1003 = vadd.f32 %v987, %v1001
        %v1004 = vadd.f32 %v988, %v1002
        %1005 = vset.pattern.permute.xlu0 2
        %1006 = vperm.xlu0 %1005, %v214
        %v1007 = vpop.permute.xlu0 %1006
        %v1009 = vlaneseq
        %v1010 = vshrl.u32 %v1009, 7
        %v1011 = vsub.s32 2, %v1010
        %v1012 = vrot.slane %v970, %v1011
        %v1013 = vlaneseq
        %v1014 = vshrl.u32 %v1013, 7
        %v1015 = vsub.s32 2, %v1014
        %v1016 = vrot.slane %v971, %v1015
        %v1017 = vmul.f32 %v1007, %v1012
        %v1018 = vmul.f32 %v1007, %v1016
        %v1019 = vadd.f32 %v1003, %v1017
        %v1020 = vadd.f32 %v1004, %v1018
        %1021 = vset.pattern.permute.xlu0 3
        %1022 = vperm.xlu0 %1021, %v214
        %v1023 = vpop.permute.xlu0 %1022
        %v1025 = vlaneseq
        %v1026 = vshrl.u32 %v1025, 7
        %v1027 = vsub.s32 3, %v1026
        %v1028 = vrot.slane %v970, %v1027
        %v1029 = vlaneseq
        %v1030 = vshrl.u32 %v1029, 7
        %v1031 = vsub.s32 3, %v1030
        %v1032 = vrot.slane %v971, %v1031
        %v1033 = vmul.f32 %v1023, %v1028
        %v1034 = vmul.f32 %v1023, %v1032
        %v1035 = vadd.f32 %v1019, %v1033
        %v1036 = vadd.f32 %v1020, %v1034
        %1038 = vset.pattern.permute.xlu0 0
        %1039 = vperm.xlu0 %1038, %v208
        %v1040 = vpop.permute.xlu0 %1039
        %v1042 = vadd.f32 %v1035, %v1040
        %v1043 = vadd.f32 %v1036, %v1040
        %1045 = vset.pattern.permute.xlu0 0
        %1046 = vperm.xlu0 %1045, %v204
        %v1047 = vpop.permute.xlu0 %1046
        %v1049 = vmul.f32 %v1042, %v1047
        %v1050 = vmul.f32 %v1043, %v1047
        %v1053 = vcombine.low %v1049, %v1050
        %v1055 = vadd.f32 %v771, %v1053
        %1056 = vst [vmem:[%s190] sm:$0xff] %v1055
        %s1057 = sand.u32 %s115, 1
        %s1058 = scalar_lea.sflag [#allocation3], %s1057
        %s1059 = sand.u32 %s115, 1
        %s1060 = smul.addr %s1059, 8
        %s1061 = scalar_lea.vmem [#allocation2], %s1060
        // Predicated region
        $region37: #{tpu_custom_call.1} parent=35 // pred_check
          %p1062 = pneg %p125
        $region38: #{tpu_custom_call.1} parent=35 // pred_check_branch
          %1064 = sbr.rel (%p1062) target = $region40
        $region39: #{tpu_custom_call.1} parent=35 // pred_region
          %s1066 = ssub.s32 128, 128
          %1067 = vsyncadd %s1058, %s1066
          %s1068 = smul.addr %s18, 2
          %s1069 = smul.addr %s1068, 64
          %s1070 = scalar_lea.hbm %s4, %s1069
          %s1072 = sshll.u32 %s1061, 4
          %s1073 = int_to_ptr.vmem [resolvable:$true] %s1072
          %1075 = dma.vmem_to_hbm [thread:$0]  %s1073, 128, %s1070, %s1058
        $region40: #{tpu_custom_call.1} parent=35 // pred_fallthru
          _
      $region36: #{tpu_custom_call.1} parent=5 // pred_fallthru
        _
      %p1076 = scmp.le.s32.totalorder 2, %s13
      // Predicated region
      $region41: #{tpu_custom_call.1} parent=5 // pred_check
        %p1077 = pneg %p1076
      $region42: #{tpu_custom_call.1} parent=5 // pred_check_branch
        %1079 = sbr.rel (%p1077) target = $region44
      $region43: #{tpu_custom_call.1} parent=5 // pred_region
        %s1080 = ssub.s32 %s13, 2
        // Predicated region
        $region45: #{tpu_custom_call.1} parent=43 // pred_check
          %p1081 = pneg %p131
        $region46: #{tpu_custom_call.1} parent=43 // pred_check_branch
          %1083 = sbr.rel (%p1081) target = $region48
        $region47: #{tpu_custom_call.1} parent=43 // pred_region
          %s1084 = sand.u32 %s116, 1
          %s1085 = scalar_lea.sflag [#allocation3], %s1084
          %s1086 = sand.u32 %s116, 1
          %s1087 = smul.addr %s1086, 8
          %s1088 = scalar_lea.vmem [#allocation2], %s1087
          %1089 = dma.done %s1085, 128
        $region48: #{tpu_custom_call.1} parent=43 // pred_fallthru
          _
      $region44: #{tpu_custom_call.1} parent=5 // pred_fallthru
        _
    $region6: #{tpu_custom_call.1} parent=1 // loop_footer
      %s17 = sadd.s32 1, %s13
    $region7: #{tpu_custom_call.1} parent=1 // loop_footer_branch
      %12 = sbr.rel target = $region3
    $region8: #{tpu_custom_call.1} parent=1 // loop_exit
      _
    %1090 = vsyncpa [#allocation3], 1
    %s1091 = scalar_lea.sflag [#allocation3], 1
    %1092 = vsyncpa %s1091, 1

</llo_original>
